<compile_context>
chip_gen: v7x
topology: tpu7x:2x2x1
jax: 0.10.0
libtpu: 0.0.40
codegen_flags: <defaults>
</compile_context>

<pallas_src>
import functools
from math import sqrt

import jax
import jax.numpy as jnp
from jax.experimental import pallas as pl
from jax.experimental.pallas import tpu as pltpu

# OGB full_atom_feature_dims (get_atom_feature_dims())
FULL_ATOM_FEATURE_DIMS = [119, 5, 12, 12, 10, 6, 6, 2, 2]

# Static per-feature row offsets into the concatenated table.
_FEAT_OFFSETS = []
_row = 0
for _d in FULL_ATOM_FEATURE_DIMS:
    _FEAT_OFFSETS.append(_row)
    _row += _d
_FEAT_OFFSETS = tuple(_FEAT_OFFSETS)
_TOTAL_ROWS = _row          # 174 for the OGB dims above
_FEAT_RANGES = tuple(zip(_FEAT_OFFSETS, FULL_ATOM_FEATURE_DIMS))


def _round_up(x, m):
    return (x + m - 1) // m * m


def atom_encoder_kernel(idx_ref, table_ref, out_ref, *, feat_ranges, k_chunk):
    # idx_ref:   (tile_n, F)      int32, raw per-feature categorical indices
    # table_ref: (r_pad, e_pad)   float32, concatenated zero-padded tables
    # out_ref:   (tile_n, e_pad)  float32
    idx = idx_ref[...]                                   # (tile_n, F)
    tile_n = idx.shape[0]
    r_pad = table_ref.shape[0]

    wrote = False
    for c in range(r_pad // k_chunk):                    # static unroll (2 chunks)
        base = c * k_chunk
        # Only features whose global row range [off, off+dim) intersects this
        # K chunk can produce a hit here -> skip the rest statically.
        active = [(i, off) for i, (off, dim) in enumerate(feat_ranges)
                  if off < base + k_chunk and off + dim > base]
        if not active:
            continue

        rows = jax.lax.broadcasted_iota(jnp.int32, (tile_n, k_chunk), 1)
        hits = jnp.zeros((tile_n, k_chunk), jnp.int32)
        for i, off in active:
            # Static offset folded into the compare, in chunk-local coords.
            hits = hits + (rows == (idx[:, i:i + 1] + (off - base))
                           ).astype(jnp.int32)
        counts = hits.astype(jnp.float32)                # single convert / chunk

        partial = jnp.dot(counts, table_ref[base:base + k_chunk, :],
                          preferred_element_type=jnp.float32)
        if not wrote:
            out_ref[...] = partial                       # first chunk: init
            wrote = True
        else:
            out_ref[...] += partial                      # later chunks: accumulate

    if not wrote:                                        # unreachable for OGB dims
        out_ref[...] = jnp.zeros_like(out_ref)


def make_atom_encoder_params(emb_dim, key):
    """xavier_uniform_ embedding tables, concatenated + padded for the kernel."""
    tables = []
    for i, dim in enumerate(FULL_ATOM_FEATURE_DIMS):
        k = jax.random.fold_in(key, i)
        # torch.nn.init.xavier_uniform_ on (dim, emb_dim): bound = sqrt(6/(dim+emb_dim))
        bound = sqrt(6.0 / (dim + emb_dim))
        tables.append(jax.random.uniform(k, (dim, emb_dim), jnp.float32,
                                         minval=-bound, maxval=bound))
    table = jnp.concatenate(tables, axis=0)              # (R, E) unpadded
    r_pad = _round_up(_TOTAL_ROWS, 128)                  # lane-align K dim
    e_pad = _round_up(emb_dim, 128)                      # lane-dense output dim
    table_padded = jnp.pad(table,
                           ((0, r_pad - _TOTAL_ROWS), (0, e_pad - emb_dim)))
    return table, table_padded


@functools.partial(jax.jit, static_argnames=("emb_dim", "tile_n", "k_chunk"))
def atom_encoder(x, table_padded, *, emb_dim, tile_n=256, k_chunk=128):
    """x: (N, F) int32.  Returns (N, emb_dim) float32."""
    n, f = x.shape
    assert f == len(FULL_ATOM_FEATURE_DIMS)
    r_pad, e_pad = table_padded.shape
    assert r_pad % k_chunk == 0

    # Pad N up to a tile multiple (padded rows yield garbage, sliced off below).
    n_pad = _round_up(n, tile_n)
    x_pad = x.astype(jnp.int32)
    if n_pad != n:
        x_pad = jnp.pad(x_pad, ((0, n_pad - n), (0, 0)))

    kernel = functools.partial(atom_encoder_kernel,
                               feat_ranges=_FEAT_RANGES,
                               k_chunk=k_chunk)

    out = pl.pallas_call(
        kernel,
        out_shape=jax.ShapeDtypeStruct((n_pad, e_pad), jnp.float32),
        grid_spec=pltpu.PrefetchScalarGridSpec(
            num_scalar_prefetch=0,
            grid=(n_pad // tile_n,),
            in_specs=[
                pl.BlockSpec((tile_n, f), lambda i: (i, 0)),     # index tile
                pl.BlockSpec((r_pad, e_pad), lambda i: (0, 0)),  # full table (constant block)
            ],
            out_specs=pl.BlockSpec((tile_n, e_pad), lambda i: (i, 0)),
        ),
        compiler_params=pltpu.CompilerParams(
            dimension_semantics=("parallel",)),          # shards node tiles across TCs (v7x)
    )(x_pad, table_padded)

    return out[:n, :emb_dim]


if __name__ == "__main__":
    key = jax.random.PRNGKey(0)

    emb_dim = 32
    num_nodes = 500          # deliberately not a multiple of tile_n
    tile_n = 256             # -> padded to 512 nodes, grid of 2 parallel tiles
    num_feats = len(FULL_ATOM_FEATURE_DIMS)

    table, table_padded = make_atom_encoder_params(emb_dim, key)

    # Deterministic synthetic atom features: each column bounded by its vocab.
    kx = jax.random.fold_in(key, 1234)
    cols = []
    for i, dim in enumerate(FULL_ATOM_FEATURE_DIMS):
        cols.append(jax.random.randint(jax.random.fold_in(kx, i),
                                       (num_nodes, 1), 0, dim, dtype=jnp.int32))
    x = jnp.concatenate(cols, axis=1)                    # (N, F)

    out = atom_encoder(x, table_padded, emb_dim=emb_dim, tile_n=tile_n)
    out = jax.block_until_ready(out)

    # Reference in plain JAX: sum of per-feature gathers from the same tables.
    ref = jnp.zeros((num_nodes, emb_dim), jnp.float32)
    for i, off in enumerate(_FEAT_OFFSETS):
        ref = ref + table[x[:, i] + off]
    assert out.shape == (num_nodes, emb_dim)
    assert jnp.allclose(out, ref, atol=1e-5), "mismatch vs reference"

    print("KERNEL_OK")
</pallas_src>

<mosaic_0001>
module attributes {stable_mosaic.version = 11 : i64} {
  func.func @atom_encoder_kernel(%arg0: i32, %arg1: memref<256x9xi32, #tpu.memory_space<vmem>>, %arg2: memref<256x128xf32, #tpu.memory_space<vmem>>, %arg3: memref<256x128xf32, #tpu.memory_space<vmem>>) attributes {dimension_semantics = [#tpu.dimension_semantics<parallel>], iteration_bounds = array<i64: 2>, scalar_prefetch = 0 : i64, scratch_operands = 0 : i64, tpu.core_type = #tpu.core_type<tc>, window_params = [{transform_indices = @transform_0, window_bounds = array<i64: 256, 9>}, {pipeline_mode = #tpu.pipeline_mode<synchronous>, transform_indices = @transform_1, window_bounds = array<i64: 256, 128>}, {transform_indices = @transform_2, window_bounds = array<i64: 256, 128>}]} {
    %c0 = arith.constant 0 : index
    %c0_0 = arith.constant 0 : index
    %0 = vector.load %arg1[%c0, %c0_0] : memref<256x9xi32, #tpu.memory_space<vmem>>, vector<256x9xi32>
    %1 = tpu.iota {dimensions = array<i32: 1>} : vector<256x128xi32>
    %c0_i32 = arith.constant 0 : i32
    %2 = vector.broadcast %c0_i32 : i32 to vector<256x128xi32>
    %3 = vector.extract_strided_slice %0 {offsets = [0, 0], sizes = [256, 1], strides = [1, 1]} : vector<256x9xi32> to vector<256x1xi32>
    %c0_i32_1 = arith.constant 0 : i32
    %4 = vector.broadcast %c0_i32_1 : i32 to vector<256x1xi32>
    %5 = arith.addi %3, %4 : vector<256x1xi32>
    %6 = vector.broadcast %5 : vector<256x1xi32> to vector<256x128xi32>
    %7 = arith.cmpi eq, %1, %6 : vector<256x128xi32>
    %8 = arith.extui %7 : vector<256x128xi1> to vector<256x128xi32>
    %9 = arith.addi %2, %8 : vector<256x128xi32>
    %10 = vector.extract_strided_slice %0 {offsets = [0, 1], sizes = [256, 1], strides = [1, 1]} : vector<256x9xi32> to vector<256x1xi32>
    %c119_i32 = arith.constant 119 : i32
    %11 = vector.broadcast %c119_i32 : i32 to vector<256x1xi32>
    %12 = arith.addi %10, %11 : vector<256x1xi32>
    %13 = vector.broadcast %12 : vector<256x1xi32> to vector<256x128xi32>
    %14 = arith.cmpi eq, %1, %13 : vector<256x128xi32>
    %15 = arith.extui %14 : vector<256x128xi1> to vector<256x128xi32>
    %16 = arith.addi %9, %15 : vector<256x128xi32>
    %17 = vector.extract_strided_slice %0 {offsets = [0, 2], sizes = [256, 1], strides = [1, 1]} : vector<256x9xi32> to vector<256x1xi32>
    %c124_i32 = arith.constant 124 : i32
    %18 = vector.broadcast %c124_i32 : i32 to vector<256x1xi32>
    %19 = arith.addi %17, %18 : vector<256x1xi32>
    %20 = vector.broadcast %19 : vector<256x1xi32> to vector<256x128xi32>
    %21 = arith.cmpi eq, %1, %20 : vector<256x128xi32>
    %22 = arith.extui %21 : vector<256x128xi1> to vector<256x128xi32>
    %23 = arith.addi %16, %22 : vector<256x128xi32>
    %24 = arith.sitofp %23 : vector<256x128xi32> to vector<256x128xf32>
    %c0_2 = arith.constant 0 : index
    %c0_3 = arith.constant 0 : index
    %25 = vector.load %arg2[%c0_2, %c0_3] : memref<256x128xf32, #tpu.memory_space<vmem>>, vector<128x128xf32>
    %cst = arith.constant dense<0.000000e+00> : vector<256x128xf32>
    %26 = tpu.matmul %24, %25, %cst {dimension_numbers = #tpu.dot_dimension_numbers<[1], [0], [0], [1], [0, 0, 1, 1], [], []>} : vector<256x128xf32>, vector<128x128xf32>, vector<256x128xf32> -> vector<256x128xf32>
    %c0_4 = arith.constant 0 : index
    %c0_5 = arith.constant 0 : index
    %27 = vector.load %arg3[%c0_4, %c0_5] : memref<256x128xf32, #tpu.memory_space<vmem>>, vector<256x128xf32>
    tpu.vector_store %arg3[%c0_4, %c0_5], %26 {strides = array<i32>} : memref<256x128xf32, #tpu.memory_space<vmem>>, vector<256x128xf32>,
    %28 = tpu.iota {dimensions = array<i32: 1>} : vector<256x128xi32>
    %c0_i32_6 = arith.constant 0 : i32
    %29 = vector.broadcast %c0_i32_6 : i32 to vector<256x128xi32>
    %30 = vector.extract_strided_slice %0 {offsets = [0, 2], sizes = [256, 1], strides = [1, 1]} : vector<256x9xi32> to vector<256x1xi32>
    %c-4_i32 = arith.constant -4 : i32
    %31 = vector.broadcast %c-4_i32 : i32 to vector<256x1xi32>
    %32 = arith.addi %30, %31 : vector<256x1xi32>
    %33 = vector.broadcast %32 : vector<256x1xi32> to vector<256x128xi32>
    %34 = arith.cmpi eq, %28, %33 : vector<256x128xi32>
    %35 = arith.extui %34 : vector<256x128xi1> to vector<256x128xi32>
    %36 = arith.addi %29, %35 : vector<256x128xi32>
    %37 = vector.extract_strided_slice %0 {offsets = [0, 3], sizes = [256, 1], strides = [1, 1]} : vector<256x9xi32> to vector<256x1xi32>
    %c8_i32 = arith.constant 8 : i32
    %38 = vector.broadcast %c8_i32 : i32 to vector<256x1xi32>
    %39 = arith.addi %37, %38 : vector<256x1xi32>
    %40 = vector.broadcast %39 : vector<256x1xi32> to vector<256x128xi32>
    %41 = arith.cmpi eq, %28, %40 : vector<256x128xi32>
    %42 = arith.extui %41 : vector<256x128xi1> to vector<256x128xi32>
    %43 = arith.addi %36, %42 : vector<256x128xi32>
    %44 = vector.extract_strided_slice %0 {offsets = [0, 4], sizes = [256, 1], strides = [1, 1]} : vector<256x9xi32> to vector<256x1xi32>
    %c20_i32 = arith.constant 20 : i32
    %45 = vector.broadcast %c20_i32 : i32 to vector<256x1xi32>
    %46 = arith.addi %44, %45 : vector<256x1xi32>
    %47 = vector.broadcast %46 : vector<256x1xi32> to vector<256x128xi32>
    %48 = arith.cmpi eq, %28, %47 : vector<256x128xi32>
    %49 = arith.extui %48 : vector<256x128xi1> to vector<256x128xi32>
    %50 = arith.addi %43, %49 : vector<256x128xi32>
    %51 = vector.extract_strided_slice %0 {offsets = [0, 5], sizes = [256, 1], strides = [1, 1]} : vector<256x9xi32> to vector<256x1xi32>
    %c30_i32 = arith.constant 30 : i32
    %52 = vector.broadcast %c30_i32 : i32 to vector<256x1xi32>
    %53 = arith.addi %51, %52 : vector<256x1xi32>
    %54 = vector.broadcast %53 : vector<256x1xi32> to vector<256x128xi32>
    %55 = arith.cmpi eq, %28, %54 : vector<256x128xi32>
    %56 = arith.extui %55 : vector<256x128xi1> to vector<256x128xi32>
    %57 = arith.addi %50, %56 : vector<256x128xi32>
    %58 = vector.extract_strided_slice %0 {offsets = [0, 6], sizes = [256, 1], strides = [1, 1]} : vector<256x9xi32> to vector<256x1xi32>
    %c36_i32 = arith.constant 36 : i32
    %59 = vector.broadcast %c36_i32 : i32 to vector<256x1xi32>
    %60 = arith.addi %58, %59 : vector<256x1xi32>
    %61 = vector.broadcast %60 : vector<256x1xi32> to vector<256x128xi32>
    %62 = arith.cmpi eq, %28, %61 : vector<256x128xi32>
    %63 = arith.extui %62 : vector<256x128xi1> to vector<256x128xi32>
    %64 = arith.addi %57, %63 : vector<256x128xi32>
    %65 = vector.extract_strided_slice %0 {offsets = [0, 7], sizes = [256, 1], strides = [1, 1]} : vector<256x9xi32> to vector<256x1xi32>
    %c42_i32 = arith.constant 42 : i32
    %66 = vector.broadcast %c42_i32 : i32 to vector<256x1xi32>
    %67 = arith.addi %65, %66 : vector<256x1xi32>
    %68 = vector.broadcast %67 : vector<256x1xi32> to vector<256x128xi32>
    %69 = arith.cmpi eq, %28, %68 : vector<256x128xi32>
    %70 = arith.extui %69 : vector<256x128xi1> to vector<256x128xi32>
    %71 = arith.addi %64, %70 : vector<256x128xi32>
    %72 = vector.extract_strided_slice %0 {offsets = [0, 8], sizes = [256, 1], strides = [1, 1]} : vector<256x9xi32> to vector<256x1xi32>
    %c44_i32 = arith.constant 44 : i32
    %73 = vector.broadcast %c44_i32 : i32 to vector<256x1xi32>
    %74 = arith.addi %72, %73 : vector<256x1xi32>
    %75 = vector.broadcast %74 : vector<256x1xi32> to vector<256x128xi32>
    %76 = arith.cmpi eq, %28, %75 : vector<256x128xi32>
    %77 = arith.extui %76 : vector<256x128xi1> to vector<256x128xi32>
    %78 = arith.addi %71, %77 : vector<256x128xi32>
    %79 = arith.sitofp %78 : vector<256x128xi32> to vector<256x128xf32>
    %c128 = arith.constant 128 : index
    %c0_7 = arith.constant 0 : index
    %80 = vector.load %arg2[%c128, %c0_7] : memref<256x128xf32, #tpu.memory_space<vmem>>, vector<128x128xf32>
    %cst_8 = arith.constant dense<0.000000e+00> : vector<256x128xf32>
    %81 = tpu.matmul %79, %80, %cst_8 {dimension_numbers = #tpu.dot_dimension_numbers<[1], [0], [0], [1], [0, 0, 1, 1], [], []>} : vector<256x128xf32>, vector<128x128xf32>, vector<256x128xf32> -> vector<256x128xf32>
    %c0_9 = arith.constant 0 : index
    %c0_10 = arith.constant 0 : index
    %82 = vector.load %arg3[%c0_9, %c0_10] : memref<256x128xf32, #tpu.memory_space<vmem>>, vector<256x128xf32>
    %83 = arith.addf %82, %81 : vector<256x128xf32>
    %c0_11 = arith.constant 0 : index
    %c0_12 = arith.constant 0 : index
    %84 = vector.load %arg3[%c0_11, %c0_12] : memref<256x128xf32, #tpu.memory_space<vmem>>, vector<256x128xf32>
    tpu.vector_store %arg3[%c0_11, %c0_12], %83 {strides = array<i32>} : memref<256x128xf32, #tpu.memory_space<vmem>>, vector<256x128xf32>,
    return
  }
  func.func @transform_0(%arg0: i32) -> (i32, i32) {
    %c0_i32 = arith.constant 0 : i32
    %c0_i32_0 = arith.constant 0 : i32
    return %arg0, %c0_i32 : i32, i32
  }
  func.func @transform_1(%arg0: i32) -> (i32, i32) {
    %c0_i32 = arith.constant 0 : i32
    %c0_i32_0 = arith.constant 0 : i32
    %c0_i32_1 = arith.constant 0 : i32
    return %c0_i32, %c0_i32_0 : i32, i32
  }
  func.func @transform_2(%arg0: i32) -> (i32, i32) {
    %c0_i32 = arith.constant 0 : i32
    %c0_i32_0 = arith.constant 0 : i32
    return %arg0, %c0_i32 : i32, i32
  }
}

</mosaic_0001>

<llo_original>
// kernel: atom_encoder.1
$region0: #{atom_encoder.1}
  #allocation0 [shape = 'u32[]', space=smem, size = 0x4, offset = 0x4, fixed_abs, tag = 'smem constant byte address 0x4 - core index']
  #allocation1 [shape = 'u32[144,128]{1,0:T(1,128)}', space=vmem, size = 0x12000, scoped, tag = 'internal scratch']
  %s0 = inlined_call_operand.vmem [shape: s32[512,9], index: 0, kind: input, shape index: {}]
  %s1 = inlined_call_operand.vmem [shape: f32[256,128], index: 1, kind: input, shape index: {}]
  %s2 = inlined_call_operand.vmem [shape: f32[512,128], index: 2, kind: output, shape index: {}]
  %s3 = sld [smem:[#allocation0]]
  $region41: #{atom_encoder.1} parent=0
    _
  %s5 = ssub.s32 1, %s3
  %s6 = scalar_select 0, %s5, %s3
  loop: start=0, step=1, limit=4
  $region2: #{atom_encoder.1} parent=0 // loop_pre_header
    _
  $region3: #{atom_encoder.1} parent=0 // loop_header
    %s8 = sphi 0, %s12
    %p9 = scmp.ge.s32.totalorder %s8, 4
    %s18 = sphi 0, %s20
    %s21 = sphi 0, %s18
    %s22 = sphi 0, %s21
    %s38 = sphi 0, %s22
    %s42 = sphi 0, %s42
    %s44 = sphi 0, %s42
    %s45 = sphi 0, %s44
    %s59 = sphi 0, %s45
    %s65 = sphi 0, %s67
    %s68 = sphi 0, %s65
    %s69 = sphi 0, %s68
    %s85 = sphi 0, %s69
  $region4: #{atom_encoder.1} parent=0 // loop_header_branch
    %11 = sbr.rel (%p9) target = $region8
  $region5: #{atom_encoder.1} parent=0 // loop_body
    %s13 = ssub.s32 %s8, 1
    %s14 = ssub.s32 %s8, 2
    %s15 = sadd.s32 %s8, 1
    %s16 = ssub.s32 %s8, %s15
    %p17 = scmp.eq.s32.totalorder %s16, 0
    %s19 = sadd.s32 %s18, 1
    %s20 = scalar_select %p17, %s18, %s19
    %p23 = pneg %p17
    %p24 = scmp.eq.s32.totalorder %s8, 1
    %p25 = por %p23, %p24
    %p26 = scmp.ne.s32.totalorder %s18, %s21
    %p27 = scmp.eq.s32.totalorder %s8, 0
    %p28 = por %p26, %p27
    %p29 = scmp.ne.s32.totalorder %s18, %s21
    %p30 = scmp.eq.s32.totalorder %s13, 1
    %p31 = por %p29, %p30
    %p32 = scmp.ne.s32.totalorder %s21, %s22
    %p33 = scmp.eq.s32.totalorder %s13, 0
    %p34 = por %p32, %p33
    %p35 = scmp.ne.s32.totalorder %s21, %s22
    %p36 = scmp.eq.s32.totalorder %s14, 1
    %p37 = por %p35, %p36
    %p39 = scmp.ne.s32.totalorder %s22, %s38
    %p40 = scmp.eq.s32.totalorder %s14, 0
    %p41 = por %p39, %p40
    %s43 = sadd.s32 %s42, 1
    %p46 = scmp.eq.s32.totalorder %s8, 1
    %p47 = scmp.ne.s32.totalorder %s42, %s44
    %p48 = scmp.eq.s32.totalorder %s8, 0
    %p49 = por %p47, %p48
    %p50 = scmp.ne.s32.totalorder %s42, %s44
    %p51 = scmp.eq.s32.totalorder %s13, 1
    %p52 = por %p50, %p51
    %p53 = scmp.ne.s32.totalorder %s44, %s45
    %p54 = scmp.eq.s32.totalorder %s13, 0
    %p55 = por %p53, %p54
    %p56 = scmp.ne.s32.totalorder %s44, %s45
    %p57 = scmp.eq.s32.totalorder %s14, 1
    %p58 = por %p56, %p57
    %p60 = scmp.ne.s32.totalorder %s45, %s59
    %p61 = scmp.eq.s32.totalorder %s14, 0
    %p62 = por %p60, %p61
    %s63 = ssub.s32 %s8, %s15
    %p64 = scmp.eq.s32.totalorder %s63, 0
    %s66 = sadd.s32 %s65, 1
    %s67 = scalar_select %p64, %s65, %s66
    %p70 = pneg %p64
    %p71 = scmp.eq.s32.totalorder %s8, 1
    %p72 = por %p70, %p71
    %p73 = scmp.ne.s32.totalorder %s65, %s68
    %p74 = scmp.eq.s32.totalorder %s8, 0
    %p75 = por %p73, %p74
    %p76 = scmp.ne.s32.totalorder %s65, %s68
    %p77 = scmp.eq.s32.totalorder %s13, 1
    %p78 = por %p76, %p77
    %p79 = scmp.ne.s32.totalorder %s68, %s69
    %p80 = scmp.eq.s32.totalorder %s13, 0
    %p81 = por %p79, %p80
    %p82 = scmp.ne.s32.totalorder %s68, %s69
    %p83 = scmp.eq.s32.totalorder %s14, 1
    %p84 = por %p82, %p83
    %p86 = scmp.ne.s32.totalorder %s69, %s85
    %p87 = scmp.eq.s32.totalorder %s14, 0
    %p88 = por %p86, %p87
    %p89 = scmp.le.s32.totalorder 1, %s8
    %p90 = scmp.lt.s32.totalorder %s8, 3
    %p91 = pnand %p89, %p90
    %p92 = pneg %p91
    // Predicated region
    $region9: #{atom_encoder.1} parent=5 // pred_check
      _
    $region10: #{atom_encoder.1} parent=5 // pred_check_branch
      %94 = sbr.rel (%p91) target = $region12
    $region11: #{atom_encoder.1} parent=5 // pred_region
      %s95 = ssub.s32 %s8, 1
      // Predicated region
      $region13: #{atom_encoder.1} parent=11 // pred_check
        %p96 = pneg %p55
      $region14: #{atom_encoder.1} parent=11 // pred_check_branch
        %98 = sbr.rel (%p96) target = $region16
      $region15: #{atom_encoder.1} parent=11 // pred_region
        _
      $region16: #{atom_encoder.1} parent=11 // pred_fallthru
        _
    $region12: #{atom_encoder.1} parent=5 // pred_fallthru
      _
    %p99 = scmp.lt.s32.totalorder %s8, 2
    // Predicated region
    $region17: #{atom_encoder.1} parent=5 // pred_check
      %p100 = pneg %p99
    $region18: #{atom_encoder.1} parent=5 // pred_check_branch
      %102 = sbr.rel (%p100) target = $region20
    $region19: #{atom_encoder.1} parent=5 // pred_region
      // Predicated region
      $region21: #{atom_encoder.1} parent=19 // pred_check
        %p103 = pneg %p28
      $region22: #{atom_encoder.1} parent=19 // pred_check_branch
        %105 = sbr.rel (%p103) target = $region24
      $region23: #{atom_encoder.1} parent=19 // pred_region
        %s106 = smul.u32 32, %s8
        %p107 = scmp.lt.s32.totalorder %s106, 63
        %s108 = scalar_select %p107, %s106, 63
        %s109 = smul.addr %s108, 8
        %s110 = scalar_lea.vmem %s0, %s109
        %s111 = smul.u32 32, %s8
      $region24: #{atom_encoder.1} parent=19 // pred_fallthru
        _
    $region20: #{atom_encoder.1} parent=5 // pred_fallthru
      _
    %p112 = scmp.le.s32.totalorder 1, %s8
    %p113 = scmp.lt.s32.totalorder %s8, 3
    %p114 = pnand %p112, %p113
    %p115 = pneg %p114
    // Predicated region
    $region25: #{atom_encoder.1} parent=5 // pred_check
      _
    $region26: #{atom_encoder.1} parent=5 // pred_check_branch
      %117 = sbr.rel (%p114) target = $region28
    $region27: #{atom_encoder.1} parent=5 // pred_region
      %s118 = ssub.s32 %s8, 1
      %s119 = smul.u32 32, %s13
      %p120 = scmp.lt.s32.totalorder %s119, 63
      %s121 = scalar_select %p120, %s119, 63
      %s122 = smul.addr %s121, 8
      %s123 = scalar_lea.vmem %s0, %s122
      %p124 = pneg %p34
      %p125 = pneg %p31
      %p126 = pneg %p55
      %p127 = pneg %p52
      %p128 = pneg %p81
      %p129 = pneg %p78
      %s130 = smul.u32 32, %s13
      %p131 = scmp.lt.s32.totalorder %s130, 63
      %s132 = scalar_select %p131, %s130, 63
      %s133 = smul.addr %s132, 8
      %s134 = scalar_lea.vmem %s2, %s133
      %s135 = smul.u32 32, %s13
      %p136 = scmp.lt.s32.totalorder %s135, 63
      %s137 = scalar_select %p136, %s135, 63
      %s138 = smul.addr %s137, 8
      %s139 = scalar_lea.vmem %s0, %s138
      %s140 = smul.u32 32, %s13
      %s141 = smul.u32 32, %s13
      %p142 = scmp.lt.s32.totalorder %s141, 63
      %s143 = scalar_select %p142, %s141, 63
      %s144 = smul.addr %s143, 8
      %s145 = scalar_lea.vmem %s2, %s144
      %s146 = smul.u32 32, %s13
      %v147 = vld [vmem:[%s139] sm:$0xff]
      %v148 = vld [vmem:[%s139 + $0x8] sm:$0xff]
      %v149 = vld [vmem:[%s139 + $0x10] sm:$0xff]
      %v150 = vld [vmem:[%s139 + $0x18] sm:$0xff]
      %v151 = vld [vmem:[%s139 + $0x20] sm:$0xff]
      %v152 = vld [vmem:[%s139 + $0x28] sm:$0xff]
      %v153 = vld [vmem:[%s139 + $0x30] sm:$0xff]
      %v154 = vld [vmem:[%s139 + $0x38] sm:$0xff]
      %v155 = vld [vmem:[%s139 + $0x40] sm:$0xff]
      %v156 = vld [vmem:[%s139 + $0x48] sm:$0xff]
      %v157 = vld [vmem:[%s139 + $0x50] sm:$0xff]
      %v158 = vld [vmem:[%s139 + $0x58] sm:$0xff]
      %v159 = vld [vmem:[%s139 + $0x60] sm:$0xff]
      %v160 = vld [vmem:[%s139 + $0x68] sm:$0xff]
      %v161 = vld [vmem:[%s139 + $0x70] sm:$0xff]
      %v162 = vld [vmem:[%s139 + $0x78] sm:$0xff]
      %v163 = vld [vmem:[%s139 + $0x80] sm:$0xff]
      %v164 = vld [vmem:[%s139 + $0x88] sm:$0xff]
      %v165 = vld [vmem:[%s139 + $0x90] sm:$0xff]
      %v166 = vld [vmem:[%s139 + $0x98] sm:$0xff]
      %v167 = vld [vmem:[%s139 + $0xa0] sm:$0xff]
      %v168 = vld [vmem:[%s139 + $0xa8] sm:$0xff]
      %v169 = vld [vmem:[%s139 + $0xb0] sm:$0xff]
      %v170 = vld [vmem:[%s139 + $0xb8] sm:$0xff]
      %v171 = vld [vmem:[%s139 + $0xc0] sm:$0xff]
      %v172 = vld [vmem:[%s139 + $0xc8] sm:$0xff]
      %v173 = vld [vmem:[%s139 + $0xd0] sm:$0xff]
      %v174 = vld [vmem:[%s139 + $0xd8] sm:$0xff]
      %v175 = vld [vmem:[%s139 + $0xe0] sm:$0xff]
      %v176 = vld [vmem:[%s139 + $0xe8] sm:$0xff]
      %v177 = vld [vmem:[%s139 + $0xf0] sm:$0xff]
      %v178 = vld [vmem:[%s139 + $0xf8] sm:$0xff]
      %v179 = vlaneseq
      %v180 = vand.u32 %v179, 127
      %181 = vset.pattern.permute.xlu0 0
      %182 = vperm.xlu0 %181, %v147
      %v183 = vpop.permute.xlu0 %182
      %184 = vset.pattern.permute.xlu0 0
      %185 = vperm.xlu0 %184, %v148
      %v186 = vpop.permute.xlu0 %185
      %187 = vset.pattern.permute.xlu0 0
      %188 = vperm.xlu0 %187, %v149
      %v189 = vpop.permute.xlu0 %188
      %190 = vset.pattern.permute.xlu0 0
      %191 = vperm.xlu0 %190, %v150
      %v192 = vpop.permute.xlu0 %191
      %193 = vset.pattern.permute.xlu0 0
      %194 = vperm.xlu0 %193, %v151
      %v195 = vpop.permute.xlu0 %194
      %196 = vset.pattern.permute.xlu0 0
      %197 = vperm.xlu0 %196, %v152
      %v198 = vpop.permute.xlu0 %197
      %199 = vset.pattern.permute.xlu0 0
      %200 = vperm.xlu0 %199, %v153
      %v201 = vpop.permute.xlu0 %200
      %202 = vset.pattern.permute.xlu0 0
      %203 = vperm.xlu0 %202, %v154
      %v204 = vpop.permute.xlu0 %203
      %205 = vset.pattern.permute.xlu0 0
      %206 = vperm.xlu0 %205, %v155
      %v207 = vpop.permute.xlu0 %206
      %208 = vset.pattern.permute.xlu0 0
      %209 = vperm.xlu0 %208, %v156
      %v210 = vpop.permute.xlu0 %209
      %211 = vset.pattern.permute.xlu0 0
      %212 = vperm.xlu0 %211, %v157
      %v213 = vpop.permute.xlu0 %212
      %214 = vset.pattern.permute.xlu0 0
      %215 = vperm.xlu0 %214, %v158
      %v216 = vpop.permute.xlu0 %215
      %217 = vset.pattern.permute.xlu0 0
      %218 = vperm.xlu0 %217, %v159
      %v219 = vpop.permute.xlu0 %218
      %220 = vset.pattern.permute.xlu0 0
      %221 = vperm.xlu0 %220, %v160
      %v222 = vpop.permute.xlu0 %221
      %223 = vset.pattern.permute.xlu0 0
      %224 = vperm.xlu0 %223, %v161
      %v225 = vpop.permute.xlu0 %224
      %226 = vset.pattern.permute.xlu0 0
      %227 = vperm.xlu0 %226, %v162
      %v228 = vpop.permute.xlu0 %227
      %229 = vset.pattern.permute.xlu0 0
      %230 = vperm.xlu0 %229, %v163
      %v231 = vpop.permute.xlu0 %230
      %232 = vset.pattern.permute.xlu0 0
      %233 = vperm.xlu0 %232, %v164
      %v234 = vpop.permute.xlu0 %233
      %235 = vset.pattern.permute.xlu0 0
      %236 = vperm.xlu0 %235, %v165
      %v237 = vpop.permute.xlu0 %236
      %238 = vset.pattern.permute.xlu0 0
      %239 = vperm.xlu0 %238, %v166
      %v240 = vpop.permute.xlu0 %239
      %241 = vset.pattern.permute.xlu0 0
      %242 = vperm.xlu0 %241, %v167
      %v243 = vpop.permute.xlu0 %242
      %244 = vset.pattern.permute.xlu0 0
      %245 = vperm.xlu0 %244, %v168
      %v246 = vpop.permute.xlu0 %245
      %247 = vset.pattern.permute.xlu0 0
      %248 = vperm.xlu0 %247, %v169
      %v249 = vpop.permute.xlu0 %248
      %250 = vset.pattern.permute.xlu0 0
      %251 = vperm.xlu0 %250, %v170
      %v252 = vpop.permute.xlu0 %251
      %253 = vset.pattern.permute.xlu0 0
      %254 = vperm.xlu0 %253, %v171
      %v255 = vpop.permute.xlu0 %254
      %256 = vset.pattern.permute.xlu0 0
      %257 = vperm.xlu0 %256, %v172
      %v258 = vpop.permute.xlu0 %257
      %259 = vset.pattern.permute.xlu0 0
      %260 = vperm.xlu0 %259, %v173
      %v261 = vpop.permute.xlu0 %260
      %262 = vset.pattern.permute.xlu0 0
      %263 = vperm.xlu0 %262, %v174
      %v264 = vpop.permute.xlu0 %263
      %265 = vset.pattern.permute.xlu0 0
      %266 = vperm.xlu0 %265, %v175
      %v267 = vpop.permute.xlu0 %266
      %268 = vset.pattern.permute.xlu0 0
      %269 = vperm.xlu0 %268, %v176
      %v270 = vpop.permute.xlu0 %269
      %271 = vset.pattern.permute.xlu0 0
      %272 = vperm.xlu0 %271, %v177
      %v273 = vpop.permute.xlu0 %272
      %274 = vset.pattern.permute.xlu0 0
      %275 = vperm.xlu0 %274, %v178
      %v276 = vpop.permute.xlu0 %275
      %vm277 = vcmp.eq.s32.totalorder %v180, %v183
      %vm278 = vcmp.eq.s32.totalorder %v180, %v186
      %vm279 = vcmp.eq.s32.totalorder %v180, %v189
      %vm280 = vcmp.eq.s32.totalorder %v180, %v192
      %vm281 = vcmp.eq.s32.totalorder %v180, %v195
      %vm282 = vcmp.eq.s32.totalorder %v180, %v198
      %vm283 = vcmp.eq.s32.totalorder %v180, %v201
      %vm284 = vcmp.eq.s32.totalorder %v180, %v204
      %vm285 = vcmp.eq.s32.totalorder %v180, %v207
      %vm286 = vcmp.eq.s32.totalorder %v180, %v210
      %vm287 = vcmp.eq.s32.totalorder %v180, %v213
      %vm288 = vcmp.eq.s32.totalorder %v180, %v216
      %vm289 = vcmp.eq.s32.totalorder %v180, %v219
      %vm290 = vcmp.eq.s32.totalorder %v180, %v222
      %vm291 = vcmp.eq.s32.totalorder %v180, %v225
      %vm292 = vcmp.eq.s32.totalorder %v180, %v228
      %vm293 = vcmp.eq.s32.totalorder %v180, %v231
      %vm294 = vcmp.eq.s32.totalorder %v180, %v234
      %vm295 = vcmp.eq.s32.totalorder %v180, %v237
      %vm296 = vcmp.eq.s32.totalorder %v180, %v240
      %vm297 = vcmp.eq.s32.totalorder %v180, %v243
      %vm298 = vcmp.eq.s32.totalorder %v180, %v246
      %vm299 = vcmp.eq.s32.totalorder %v180, %v249
      %vm300 = vcmp.eq.s32.totalorder %v180, %v252
      %vm301 = vcmp.eq.s32.totalorder %v180, %v255
      %vm302 = vcmp.eq.s32.totalorder %v180, %v258
      %vm303 = vcmp.eq.s32.totalorder %v180, %v261
      %vm304 = vcmp.eq.s32.totalorder %v180, %v264
      %vm305 = vcmp.eq.s32.totalorder %v180, %v267
      %vm306 = vcmp.eq.s32.totalorder %v180, %v270
      %vm307 = vcmp.eq.s32.totalorder %v180, %v273
      %vm308 = vcmp.eq.s32.totalorder %v180, %v276
      %v309 = vsel %vm277, 1, 0
      %v310 = vsel %vm278, 1, 0
      %v311 = vsel %vm279, 1, 0
      %v312 = vsel %vm280, 1, 0
      %v313 = vsel %vm281, 1, 0
      %v314 = vsel %vm282, 1, 0
      %v315 = vsel %vm283, 1, 0
      %v316 = vsel %vm284, 1, 0
      %v317 = vsel %vm285, 1, 0
      %v318 = vsel %vm286, 1, 0
      %v319 = vsel %vm287, 1, 0
      %v320 = vsel %vm288, 1, 0
      %v321 = vsel %vm289, 1, 0
      %v322 = vsel %vm290, 1, 0
      %v323 = vsel %vm291, 1, 0
      %v324 = vsel %vm292, 1, 0
      %v325 = vsel %vm293, 1, 0
      %v326 = vsel %vm294, 1, 0
      %v327 = vsel %vm295, 1, 0
      %v328 = vsel %vm296, 1, 0
      %v329 = vsel %vm297, 1, 0
      %v330 = vsel %vm298, 1, 0
      %v331 = vsel %vm299, 1, 0
      %v332 = vsel %vm300, 1, 0
      %v333 = vsel %vm301, 1, 0
      %v334 = vsel %vm302, 1, 0
      %v335 = vsel %vm303, 1, 0
      %v336 = vsel %vm304, 1, 0
      %v337 = vsel %vm305, 1, 0
      %v338 = vsel %vm306, 1, 0
      %v339 = vsel %vm307, 1, 0
      %v340 = vsel %vm308, 1, 0
      %v341 = vadd.s32 %v147, 119
      %v342 = vadd.s32 %v148, 119
      %v343 = vadd.s32 %v149, 119
      %v344 = vadd.s32 %v150, 119
      %v345 = vadd.s32 %v151, 119
      %v346 = vadd.s32 %v152, 119
      %v347 = vadd.s32 %v153, 119
      %v348 = vadd.s32 %v154, 119
      %v349 = vadd.s32 %v155, 119
      %v350 = vadd.s32 %v156, 119
      %v351 = vadd.s32 %v157, 119
      %v352 = vadd.s32 %v158, 119
      %v353 = vadd.s32 %v159, 119
      %v354 = vadd.s32 %v160, 119
      %v355 = vadd.s32 %v161, 119
      %v356 = vadd.s32 %v162, 119
      %v357 = vadd.s32 %v163, 119
      %v358 = vadd.s32 %v164, 119
      %v359 = vadd.s32 %v165, 119
      %v360 = vadd.s32 %v166, 119
      %v361 = vadd.s32 %v167, 119
      %v362 = vadd.s32 %v168, 119
      %v363 = vadd.s32 %v169, 119
      %v364 = vadd.s32 %v170, 119
      %v365 = vadd.s32 %v171, 119
      %v366 = vadd.s32 %v172, 119
      %v367 = vadd.s32 %v173, 119
      %v368 = vadd.s32 %v174, 119
      %v369 = vadd.s32 %v175, 119
      %v370 = vadd.s32 %v176, 119
      %v371 = vadd.s32 %v177, 119
      %v372 = vadd.s32 %v178, 119
      %373 = vset.pattern.permute.xlu0 1
      %374 = vperm.xlu0 %373, %v341
      %v375 = vpop.permute.xlu0 %374
      %376 = vset.pattern.permute.xlu0 1
      %377 = vperm.xlu0 %376, %v342
      %v378 = vpop.permute.xlu0 %377
      %379 = vset.pattern.permute.xlu0 1
      %380 = vperm.xlu0 %379, %v343
      %v381 = vpop.permute.xlu0 %380
      %382 = vset.pattern.permute.xlu0 1
      %383 = vperm.xlu0 %382, %v344
      %v384 = vpop.permute.xlu0 %383
      %385 = vset.pattern.permute.xlu0 1
      %386 = vperm.xlu0 %385, %v345
      %v387 = vpop.permute.xlu0 %386
      %388 = vset.pattern.permute.xlu0 1
      %389 = vperm.xlu0 %388, %v346
      %v390 = vpop.permute.xlu0 %389
      %391 = vset.pattern.permute.xlu0 1
      %392 = vperm.xlu0 %391, %v347
      %v393 = vpop.permute.xlu0 %392
      %394 = vset.pattern.permute.xlu0 1
      %395 = vperm.xlu0 %394, %v348
      %v396 = vpop.permute.xlu0 %395
      %397 = vset.pattern.permute.xlu0 1
      %398 = vperm.xlu0 %397, %v349
      %v399 = vpop.permute.xlu0 %398
      %400 = vset.pattern.permute.xlu0 1
      %401 = vperm.xlu0 %400, %v350
      %v402 = vpop.permute.xlu0 %401
      %403 = vset.pattern.permute.xlu0 1
      %404 = vperm.xlu0 %403, %v351
      %v405 = vpop.permute.xlu0 %404
      %406 = vset.pattern.permute.xlu0 1
      %407 = vperm.xlu0 %406, %v352
      %v408 = vpop.permute.xlu0 %407
      %409 = vset.pattern.permute.xlu0 1
      %410 = vperm.xlu0 %409, %v353
      %v411 = vpop.permute.xlu0 %410
      %412 = vset.pattern.permute.xlu0 1
      %413 = vperm.xlu0 %412, %v354
      %v414 = vpop.permute.xlu0 %413
      %415 = vset.pattern.permute.xlu0 1
      %416 = vperm.xlu0 %415, %v355
      %v417 = vpop.permute.xlu0 %416
      %418 = vset.pattern.permute.xlu0 1
      %419 = vperm.xlu0 %418, %v356
      %v420 = vpop.permute.xlu0 %419
      %421 = vset.pattern.permute.xlu0 1
      %422 = vperm.xlu0 %421, %v357
      %v423 = vpop.permute.xlu0 %422
      %424 = vset.pattern.permute.xlu0 1
      %425 = vperm.xlu0 %424, %v358
      %v426 = vpop.permute.xlu0 %425
      %427 = vset.pattern.permute.xlu0 1
      %428 = vperm.xlu0 %427, %v359
      %v429 = vpop.permute.xlu0 %428
      %430 = vset.pattern.permute.xlu0 1
      %431 = vperm.xlu0 %430, %v360
      %v432 = vpop.permute.xlu0 %431
      %433 = vset.pattern.permute.xlu0 1
      %434 = vperm.xlu0 %433, %v361
      %v435 = vpop.permute.xlu0 %434
      %436 = vset.pattern.permute.xlu0 1
      %437 = vperm.xlu0 %436, %v362
      %v438 = vpop.permute.xlu0 %437
      %439 = vset.pattern.permute.xlu0 1
      %440 = vperm.xlu0 %439, %v363
      %v441 = vpop.permute.xlu0 %440
      %442 = vset.pattern.permute.xlu0 1
      %443 = vperm.xlu0 %442, %v364
      %v444 = vpop.permute.xlu0 %443
      %445 = vset.pattern.permute.xlu0 1
      %446 = vperm.xlu0 %445, %v365
      %v447 = vpop.permute.xlu0 %446
      %448 = vset.pattern.permute.xlu0 1
      %449 = vperm.xlu0 %448, %v366
      %v450 = vpop.permute.xlu0 %449
      %451 = vset.pattern.permute.xlu0 1
      %452 = vperm.xlu0 %451, %v367
      %v453 = vpop.permute.xlu0 %452
      %454 = vset.pattern.permute.xlu0 1
      %455 = vperm.xlu0 %454, %v368
      %v456 = vpop.permute.xlu0 %455
      %457 = vset.pattern.permute.xlu0 1
      %458 = vperm.xlu0 %457, %v369
      %v459 = vpop.permute.xlu0 %458
      %460 = vset.pattern.permute.xlu0 1
      %461 = vperm.xlu0 %460, %v370
      %v462 = vpop.permute.xlu0 %461
      %463 = vset.pattern.permute.xlu0 1
      %464 = vperm.xlu0 %463, %v371
      %v465 = vpop.permute.xlu0 %464
      %466 = vset.pattern.permute.xlu0 1
      %467 = vperm.xlu0 %466, %v372
      %v468 = vpop.permute.xlu0 %467
      %vm469 = vcmp.eq.s32.totalorder %v180, %v375
      %vm470 = vcmp.eq.s32.totalorder %v180, %v378
      %vm471 = vcmp.eq.s32.totalorder %v180, %v381
      %vm472 = vcmp.eq.s32.totalorder %v180, %v384
      %vm473 = vcmp.eq.s32.totalorder %v180, %v387
      %vm474 = vcmp.eq.s32.totalorder %v180, %v390
      %vm475 = vcmp.eq.s32.totalorder %v180, %v393
      %vm476 = vcmp.eq.s32.totalorder %v180, %v396
      %vm477 = vcmp.eq.s32.totalorder %v180, %v399
      %vm478 = vcmp.eq.s32.totalorder %v180, %v402
      %vm479 = vcmp.eq.s32.totalorder %v180, %v405
      %vm480 = vcmp.eq.s32.totalorder %v180, %v408
      %vm481 = vcmp.eq.s32.totalorder %v180, %v411
      %vm482 = vcmp.eq.s32.totalorder %v180, %v414
      %vm483 = vcmp.eq.s32.totalorder %v180, %v417
      %vm484 = vcmp.eq.s32.totalorder %v180, %v420
      %vm485 = vcmp.eq.s32.totalorder %v180, %v423
      %vm486 = vcmp.eq.s32.totalorder %v180, %v426
      %vm487 = vcmp.eq.s32.totalorder %v180, %v429
      %vm488 = vcmp.eq.s32.totalorder %v180, %v432
      %vm489 = vcmp.eq.s32.totalorder %v180, %v435
      %vm490 = vcmp.eq.s32.totalorder %v180, %v438
      %vm491 = vcmp.eq.s32.totalorder %v180, %v441
      %vm492 = vcmp.eq.s32.totalorder %v180, %v444
      %vm493 = vcmp.eq.s32.totalorder %v180, %v447
      %vm494 = vcmp.eq.s32.totalorder %v180, %v450
      %vm495 = vcmp.eq.s32.totalorder %v180, %v453
      %vm496 = vcmp.eq.s32.totalorder %v180, %v456
      %vm497 = vcmp.eq.s32.totalorder %v180, %v459
      %vm498 = vcmp.eq.s32.totalorder %v180, %v462
      %vm499 = vcmp.eq.s32.totalorder %v180, %v465
      %vm500 = vcmp.eq.s32.totalorder %v180, %v468
      %v501 = vsel %vm469, 1, 0
      %v502 = vsel %vm470, 1, 0
      %v503 = vsel %vm471, 1, 0
      %v504 = vsel %vm472, 1, 0
      %v505 = vsel %vm473, 1, 0
      %v506 = vsel %vm474, 1, 0
      %v507 = vsel %vm475, 1, 0
      %v508 = vsel %vm476, 1, 0
      %v509 = vsel %vm477, 1, 0
      %v510 = vsel %vm478, 1, 0
      %v511 = vsel %vm479, 1, 0
      %v512 = vsel %vm480, 1, 0
      %v513 = vsel %vm481, 1, 0
      %v514 = vsel %vm482, 1, 0
      %v515 = vsel %vm483, 1, 0
      %v516 = vsel %vm484, 1, 0
      %v517 = vsel %vm485, 1, 0
      %v518 = vsel %vm486, 1, 0
      %v519 = vsel %vm487, 1, 0
      %v520 = vsel %vm488, 1, 0
      %v521 = vsel %vm489, 1, 0
      %v522 = vsel %vm490, 1, 0
      %v523 = vsel %vm491, 1, 0
      %v524 = vsel %vm492, 1, 0
      %v525 = vsel %vm493, 1, 0
      %v526 = vsel %vm494, 1, 0
      %v527 = vsel %vm495, 1, 0
      %v528 = vsel %vm496, 1, 0
      %v529 = vsel %vm497, 1, 0
      %v530 = vsel %vm498, 1, 0
      %v531 = vsel %vm499, 1, 0
      %v532 = vsel %vm500, 1, 0
      %v533 = vadd.s32 %v309, %v501
      %v534 = vadd.s32 %v310, %v502
      %v535 = vadd.s32 %v311, %v503
      %v536 = vadd.s32 %v312, %v504
      %v537 = vadd.s32 %v313, %v505
      %v538 = vadd.s32 %v314, %v506
      %v539 = vadd.s32 %v315, %v507
      %v540 = vadd.s32 %v316, %v508
      %v541 = vadd.s32 %v317, %v509
      %v542 = vadd.s32 %v318, %v510
      %v543 = vadd.s32 %v319, %v511
      %v544 = vadd.s32 %v320, %v512
      %v545 = vadd.s32 %v321, %v513
      %v546 = vadd.s32 %v322, %v514
      %v547 = vadd.s32 %v323, %v515
      %v548 = vadd.s32 %v324, %v516
      %v549 = vadd.s32 %v325, %v517
      %v550 = vadd.s32 %v326, %v518
      %v551 = vadd.s32 %v327, %v519
      %v552 = vadd.s32 %v328, %v520
      %v553 = vadd.s32 %v329, %v521
      %v554 = vadd.s32 %v330, %v522
      %v555 = vadd.s32 %v331, %v523
      %v556 = vadd.s32 %v332, %v524
      %v557 = vadd.s32 %v333, %v525
      %v558 = vadd.s32 %v334, %v526
      %v559 = vadd.s32 %v335, %v527
      %v560 = vadd.s32 %v336, %v528
      %v561 = vadd.s32 %v337, %v529
      %v562 = vadd.s32 %v338, %v530
      %v563 = vadd.s32 %v339, %v531
      %v564 = vadd.s32 %v340, %v532
      %v565 = vadd.s32 %v147, 124
      %v566 = vadd.s32 %v148, 124
      %v567 = vadd.s32 %v149, 124
      %v568 = vadd.s32 %v150, 124
      %v569 = vadd.s32 %v151, 124
      %v570 = vadd.s32 %v152, 124
      %v571 = vadd.s32 %v153, 124
      %v572 = vadd.s32 %v154, 124
      %v573 = vadd.s32 %v155, 124
      %v574 = vadd.s32 %v156, 124
      %v575 = vadd.s32 %v157, 124
      %v576 = vadd.s32 %v158, 124
      %v577 = vadd.s32 %v159, 124
      %v578 = vadd.s32 %v160, 124
      %v579 = vadd.s32 %v161, 124
      %v580 = vadd.s32 %v162, 124
      %v581 = vadd.s32 %v163, 124
      %v582 = vadd.s32 %v164, 124
      %v583 = vadd.s32 %v165, 124
      %v584 = vadd.s32 %v166, 124
      %v585 = vadd.s32 %v167, 124
      %v586 = vadd.s32 %v168, 124
      %v587 = vadd.s32 %v169, 124
      %v588 = vadd.s32 %v170, 124
      %v589 = vadd.s32 %v171, 124
      %v590 = vadd.s32 %v172, 124
      %v591 = vadd.s32 %v173, 124
      %v592 = vadd.s32 %v174, 124
      %v593 = vadd.s32 %v175, 124
      %v594 = vadd.s32 %v176, 124
      %v595 = vadd.s32 %v177, 124
      %v596 = vadd.s32 %v178, 124
      %597 = vset.pattern.permute.xlu0 2
      %598 = vperm.xlu0 %597, %v565
      %v599 = vpop.permute.xlu0 %598
      %600 = vset.pattern.permute.xlu0 2
      %601 = vperm.xlu0 %600, %v566
      %v602 = vpop.permute.xlu0 %601
      %603 = vset.pattern.permute.xlu0 2
      %604 = vperm.xlu0 %603, %v567
      %v605 = vpop.permute.xlu0 %604
      %606 = vset.pattern.permute.xlu0 2
      %607 = vperm.xlu0 %606, %v568
      %v608 = vpop.permute.xlu0 %607
      %609 = vset.pattern.permute.xlu0 2
      %610 = vperm.xlu0 %609, %v569
      %v611 = vpop.permute.xlu0 %610
      %612 = vset.pattern.permute.xlu0 2
      %613 = vperm.xlu0 %612, %v570
      %v614 = vpop.permute.xlu0 %613
      %615 = vset.pattern.permute.xlu0 2
      %616 = vperm.xlu0 %615, %v571
      %v617 = vpop.permute.xlu0 %616
      %618 = vset.pattern.permute.xlu0 2
      %619 = vperm.xlu0 %618, %v572
      %v620 = vpop.permute.xlu0 %619
      %621 = vset.pattern.permute.xlu0 2
      %622 = vperm.xlu0 %621, %v573
      %v623 = vpop.permute.xlu0 %622
      %624 = vset.pattern.permute.xlu0 2
      %625 = vperm.xlu0 %624, %v574
      %v626 = vpop.permute.xlu0 %625
      %627 = vset.pattern.permute.xlu0 2
      %628 = vperm.xlu0 %627, %v575
      %v629 = vpop.permute.xlu0 %628
      %630 = vset.pattern.permute.xlu0 2
      %631 = vperm.xlu0 %630, %v576
      %v632 = vpop.permute.xlu0 %631
      %633 = vset.pattern.permute.xlu0 2
      %634 = vperm.xlu0 %633, %v577
      %v635 = vpop.permute.xlu0 %634
      %636 = vset.pattern.permute.xlu0 2
      %637 = vperm.xlu0 %636, %v578
      %v638 = vpop.permute.xlu0 %637
      %639 = vset.pattern.permute.xlu0 2
      %640 = vperm.xlu0 %639, %v579
      %v641 = vpop.permute.xlu0 %640
      %642 = vset.pattern.permute.xlu0 2
      %643 = vperm.xlu0 %642, %v580
      %v644 = vpop.permute.xlu0 %643
      %645 = vset.pattern.permute.xlu0 2
      %646 = vperm.xlu0 %645, %v581
      %v647 = vpop.permute.xlu0 %646
      %648 = vset.pattern.permute.xlu0 2
      %649 = vperm.xlu0 %648, %v582
      %v650 = vpop.permute.xlu0 %649
      %651 = vset.pattern.permute.xlu0 2
      %652 = vperm.xlu0 %651, %v583
      %v653 = vpop.permute.xlu0 %652
      %654 = vset.pattern.permute.xlu0 2
      %655 = vperm.xlu0 %654, %v584
      %v656 = vpop.permute.xlu0 %655
      %657 = vset.pattern.permute.xlu0 2
      %658 = vperm.xlu0 %657, %v585
      %v659 = vpop.permute.xlu0 %658
      %660 = vset.pattern.permute.xlu0 2
      %661 = vperm.xlu0 %660, %v586
      %v662 = vpop.permute.xlu0 %661
      %663 = vset.pattern.permute.xlu0 2
      %664 = vperm.xlu0 %663, %v587
      %v665 = vpop.permute.xlu0 %664
      %666 = vset.pattern.permute.xlu0 2
      %667 = vperm.xlu0 %666, %v588
      %v668 = vpop.permute.xlu0 %667
      %669 = vset.pattern.permute.xlu0 2
      %670 = vperm.xlu0 %669, %v589
      %v671 = vpop.permute.xlu0 %670
      %672 = vset.pattern.permute.xlu0 2
      %673 = vperm.xlu0 %672, %v590
      %v674 = vpop.permute.xlu0 %673
      %675 = vset.pattern.permute.xlu0 2
      %676 = vperm.xlu0 %675, %v591
      %v677 = vpop.permute.xlu0 %676
      %678 = vset.pattern.permute.xlu0 2
      %679 = vperm.xlu0 %678, %v592
      %v680 = vpop.permute.xlu0 %679
      %681 = vset.pattern.permute.xlu0 2
      %682 = vperm.xlu0 %681, %v593
      %v683 = vpop.permute.xlu0 %682
      %684 = vset.pattern.permute.xlu0 2
      %685 = vperm.xlu0 %684, %v594
      %v686 = vpop.permute.xlu0 %685
      %687 = vset.pattern.permute.xlu0 2
      %688 = vperm.xlu0 %687, %v595
      %v689 = vpop.permute.xlu0 %688
      %690 = vset.pattern.permute.xlu0 2
      %691 = vperm.xlu0 %690, %v596
      %v692 = vpop.permute.xlu0 %691
      %vm693 = vcmp.eq.s32.totalorder %v180, %v599
      %vm694 = vcmp.eq.s32.totalorder %v180, %v602
      %vm695 = vcmp.eq.s32.totalorder %v180, %v605
      %vm696 = vcmp.eq.s32.totalorder %v180, %v608
      %vm697 = vcmp.eq.s32.totalorder %v180, %v611
      %vm698 = vcmp.eq.s32.totalorder %v180, %v614
      %vm699 = vcmp.eq.s32.totalorder %v180, %v617
      %vm700 = vcmp.eq.s32.totalorder %v180, %v620
      %vm701 = vcmp.eq.s32.totalorder %v180, %v623
      %vm702 = vcmp.eq.s32.totalorder %v180, %v626
      %vm703 = vcmp.eq.s32.totalorder %v180, %v629
      %vm704 = vcmp.eq.s32.totalorder %v180, %v632
      %vm705 = vcmp.eq.s32.totalorder %v180, %v635
      %vm706 = vcmp.eq.s32.totalorder %v180, %v638
      %vm707 = vcmp.eq.s32.totalorder %v180, %v641
      %vm708 = vcmp.eq.s32.totalorder %v180, %v644
      %vm709 = vcmp.eq.s32.totalorder %v180, %v647
      %vm710 = vcmp.eq.s32.totalorder %v180, %v650
      %vm711 = vcmp.eq.s32.totalorder %v180, %v653
      %vm712 = vcmp.eq.s32.totalorder %v180, %v656
      %vm713 = vcmp.eq.s32.totalorder %v180, %v659
      %vm714 = vcmp.eq.s32.totalorder %v180, %v662
      %vm715 = vcmp.eq.s32.totalorder %v180, %v665
      %vm716 = vcmp.eq.s32.totalorder %v180, %v668
      %vm717 = vcmp.eq.s32.totalorder %v180, %v671
      %vm718 = vcmp.eq.s32.totalorder %v180, %v674
      %vm719 = vcmp.eq.s32.totalorder %v180, %v677
      %vm720 = vcmp.eq.s32.totalorder %v180, %v680
      %vm721 = vcmp.eq.s32.totalorder %v180, %v683
      %vm722 = vcmp.eq.s32.totalorder %v180, %v686
      %vm723 = vcmp.eq.s32.totalorder %v180, %v689
      %vm724 = vcmp.eq.s32.totalorder %v180, %v692
      %v725 = vsel %vm693, 1, 0
      %v726 = vsel %vm694, 1, 0
      %v727 = vsel %vm695, 1, 0
      %v728 = vsel %vm696, 1, 0
      %v729 = vsel %vm697, 1, 0
      %v730 = vsel %vm698, 1, 0
      %v731 = vsel %vm699, 1, 0
      %v732 = vsel %vm700, 1, 0
      %v733 = vsel %vm701, 1, 0
      %v734 = vsel %vm702, 1, 0
      %v735 = vsel %vm703, 1, 0
      %v736 = vsel %vm704, 1, 0
      %v737 = vsel %vm705, 1, 0
      %v738 = vsel %vm706, 1, 0
      %v739 = vsel %vm707, 1, 0
      %v740 = vsel %vm708, 1, 0
      %v741 = vsel %vm709, 1, 0
      %v742 = vsel %vm710, 1, 0
      %v743 = vsel %vm711, 1, 0
      %v744 = vsel %vm712, 1, 0
      %v745 = vsel %vm713, 1, 0
      %v746 = vsel %vm714, 1, 0
      %v747 = vsel %vm715, 1, 0
      %v748 = vsel %vm716, 1, 0
      %v749 = vsel %vm717, 1, 0
      %v750 = vsel %vm718, 1, 0
      %v751 = vsel %vm719, 1, 0
      %v752 = vsel %vm720, 1, 0
      %v753 = vsel %vm721, 1, 0
      %v754 = vsel %vm722, 1, 0
      %v755 = vsel %vm723, 1, 0
      %v756 = vsel %vm724, 1, 0
      %v757 = vadd.s32 %v533, %v725
      %v758 = vadd.s32 %v534, %v726
      %v759 = vadd.s32 %v535, %v727
      %v760 = vadd.s32 %v536, %v728
      %v761 = vadd.s32 %v537, %v729
      %v762 = vadd.s32 %v538, %v730
      %v763 = vadd.s32 %v539, %v731
      %v764 = vadd.s32 %v540, %v732
      %v765 = vadd.s32 %v541, %v733
      %v766 = vadd.s32 %v542, %v734
      %v767 = vadd.s32 %v543, %v735
      %v768 = vadd.s32 %v544, %v736
      %v769 = vadd.s32 %v545, %v737
      %v770 = vadd.s32 %v546, %v738
      %v771 = vadd.s32 %v547, %v739
      %v772 = vadd.s32 %v548, %v740
      %v773 = vadd.s32 %v549, %v741
      %v774 = vadd.s32 %v550, %v742
      %v775 = vadd.s32 %v551, %v743
      %v776 = vadd.s32 %v552, %v744
      %v777 = vadd.s32 %v553, %v745
      %v778 = vadd.s32 %v554, %v746
      %v779 = vadd.s32 %v555, %v747
      %v780 = vadd.s32 %v556, %v748
      %v781 = vadd.s32 %v557, %v749
      %v782 = vadd.s32 %v558, %v750
      %v783 = vadd.s32 %v559, %v751
      %v784 = vadd.s32 %v560, %v752
      %v785 = vadd.s32 %v561, %v753
      %v786 = vadd.s32 %v562, %v754
      %v787 = vadd.s32 %v563, %v755
      %v788 = vadd.s32 %v564, %v756
      %v789 = vcvt.s32.f32 %v757
      %v790 = vcvt.s32.f32 %v758
      %v791 = vcvt.s32.f32 %v759
      %v792 = vcvt.s32.f32 %v760
      %v793 = vcvt.s32.f32 %v761
      %v794 = vcvt.s32.f32 %v762
      %v795 = vcvt.s32.f32 %v763
      %v796 = vcvt.s32.f32 %v764
      %v797 = vcvt.s32.f32 %v765
      %v798 = vcvt.s32.f32 %v766
      %v799 = vcvt.s32.f32 %v767
      %v800 = vcvt.s32.f32 %v768
      %v801 = vcvt.s32.f32 %v769
      %v802 = vcvt.s32.f32 %v770
      %v803 = vcvt.s32.f32 %v771
      %v804 = vcvt.s32.f32 %v772
      %v805 = vcvt.s32.f32 %v773
      %v806 = vcvt.s32.f32 %v774
      %v807 = vcvt.s32.f32 %v775
      %v808 = vcvt.s32.f32 %v776
      %v809 = vcvt.s32.f32 %v777
      %v810 = vcvt.s32.f32 %v778
      %v811 = vcvt.s32.f32 %v779
      %v812 = vcvt.s32.f32 %v780
      %v813 = vcvt.s32.f32 %v781
      %v814 = vcvt.s32.f32 %v782
      %v815 = vcvt.s32.f32 %v783
      %v816 = vcvt.s32.f32 %v784
      %v817 = vcvt.s32.f32 %v785
      %v818 = vcvt.s32.f32 %v786
      %v819 = vcvt.s32.f32 %v787
      %v820 = vcvt.s32.f32 %v788
      %v821 = vld [vmem:[%s1] sm:$0xff]
      %v822 = vld [vmem:[%s1 + $0x8] sm:$0xff]
      %v823 = vld [vmem:[%s1 + $0x10] sm:$0xff]
      %v824 = vld [vmem:[%s1 + $0x18] sm:$0xff]
      %v825 = vld [vmem:[%s1 + $0x20] sm:$0xff]
      %v826 = vld [vmem:[%s1 + $0x28] sm:$0xff]
      %v827 = vld [vmem:[%s1 + $0x30] sm:$0xff]
      %v828 = vld [vmem:[%s1 + $0x38] sm:$0xff]
      %v829 = vld [vmem:[%s1 + $0x40] sm:$0xff]
      %v830 = vld [vmem:[%s1 + $0x48] sm:$0xff]
      %v831 = vld [vmem:[%s1 + $0x50] sm:$0xff]
      %v832 = vld [vmem:[%s1 + $0x58] sm:$0xff]
      %v833 = vld [vmem:[%s1 + $0x60] sm:$0xff]
      %v834 = vld [vmem:[%s1 + $0x68] sm:$0xff]
      %v835 = vld [vmem:[%s1 + $0x70] sm:$0xff]
      %v836 = vld [vmem:[%s1 + $0x78] sm:$0xff]
      %837 = vmatprep.subr.mxu0 0.0
      %838 = vmatpush1.msra.mxu0 %v821
      %839 = vmatprep.subr.mxu0 0.0
      %840 = vmatpush1.msra.mxu0 %v822
      %841 = vmatprep.subr.mxu0 0.0
      %842 = vmatpush1.msra.mxu0 %v823
      %843 = vmatprep.subr.mxu0 0.0
      %844 = vmatpush1.msra.mxu0 %v824
      %845 = vmatprep.subr.mxu0 0.0
      %846 = vmatpush1.msra.mxu0 %v825
      %847 = vmatprep.subr.mxu0 0.0
      %848 = vmatpush1.msra.mxu0 %v826
      %849 = vmatprep.subr.mxu0 0.0
      %850 = vmatpush1.msra.mxu0 %v827
      %851 = vmatprep.subr.mxu0 0.0
      %852 = vmatpush1.msra.mxu0 %v828
      %853 = vmatprep.subr.mxu0 0.0
      %854 = vmatpush1.msra.mxu0 %v829
      %855 = vmatprep.subr.mxu0 0.0
      %856 = vmatpush1.msra.mxu0 %v830
      %857 = vmatprep.subr.mxu0 0.0
      %858 = vmatpush1.msra.mxu0 %v831
      %859 = vmatprep.subr.mxu0 0.0
      %860 = vmatpush1.msra.mxu0 %v832
      %861 = vmatprep.subr.mxu0 0.0
      %862 = vmatpush1.msra.mxu0 %v833
      %863 = vmatprep.subr.mxu0 0.0
      %864 = vmatpush1.msra.mxu0 %v834
      %865 = vmatprep.subr.mxu0 0.0
      %866 = vmatpush1.msra.mxu0 %v835
      %867 = vmatprep.subr.mxu0 0.0
      %868 = vmatpush1.msra.mxu0 %v836
      %869 = vmatprep.subr.mxu0 0.0
      %870 = vmatpush1.msra.mxu0 0.0
      %871 = vmatprep.subr.mxu0 0.0
      %872 = vmatpush1.msra.mxu0 0.0
      %873 = vmatprep.subr.mxu0 0.0
      %874 = vmatpush1.msra.mxu0 0.0
      %875 = vmatprep.subr.mxu0 0.0
      %876 = vmatpush1.msra.mxu0 0.0
      %877 = vmatprep.subr.mxu0 0.0
      %878 = vmatpush1.msra.mxu0 0.0
      %879 = vmatprep.subr.mxu0 0.0
      %880 = vmatpush1.msra.mxu0 0.0
      %881 = vmatprep.subr.mxu0 0.0
      %882 = vmatpush1.msra.mxu0 0.0
      %883 = vmatprep.subr.mxu0 0.0
      %884 = vmatpush1.msra.mxu0 0.0
      %885 = vmatprep.subr.mxu0 0.0
      %886 = vmatpush1.msra.mxu0 0.0
      %887 = vmatprep.subr.mxu0 0.0
      %888 = vmatpush1.msra.mxu0 0.0
      %889 = vmatprep.subr.mxu0 0.0
      %890 = vmatpush1.msra.mxu0 0.0
      %891 = vmatprep.subr.mxu0 0.0
      %892 = vmatpush1.msra.mxu0 0.0
      %893 = vmatprep.subr.mxu0 0.0
      %894 = vmatpush1.msra.mxu0 0.0
      %895 = vmatprep.subr.mxu0 0.0
      %896 = vmatpush1.msra.mxu0 0.0
      %897 = vmatprep.subr.mxu0 0.0
      %898 = vmatpush1.msra.mxu0 0.0
      %899 = vmatprep.subr.mxu0 0.0
      %900 = vmatpush1.msra.mxu0 0.0
      %901 = vmatprep.mubr.f32.mxu0 0.0
      %902 = vmatmul.mubr.f32.gmra.mrb[0].mxu0 %v789
      %v903 = vpop.f32.mrb[0].mxu0
      %v904 = vadd.f32 0.0, %v903
      %v905 = vpop.f32.mrb[0].mxu0
      %906 = vmatprep.mubr.f32.mxu0 0.0
      %907 = vmatmul.mubr.f32.gmra.mrb[0].mxu0 %v790
      %v908 = vpop.f32.mrb[0].mxu0
      %v909 = vadd.f32 0.0, %v908
      %v910 = vpop.f32.mrb[0].mxu0
      %911 = vmatprep.mubr.f32.mxu0 0.0
      %912 = vmatmul.mubr.f32.gmra.mrb[0].mxu0 %v791
      %v913 = vpop.f32.mrb[0].mxu0
      %v914 = vadd.f32 0.0, %v913
      %v915 = vpop.f32.mrb[0].mxu0
      %916 = vmatprep.mubr.f32.mxu0 0.0
      %917 = vmatmul.mubr.f32.gmra.mrb[0].mxu0 %v792
      %v918 = vpop.f32.mrb[0].mxu0
      %v919 = vadd.f32 0.0, %v918
      %v920 = vpop.f32.mrb[0].mxu0
      %921 = vmatprep.mubr.f32.mxu0 0.0
      %922 = vmatmul.mubr.f32.gmra.mrb[0].mxu0 %v793
      %v923 = vpop.f32.mrb[0].mxu0
      %v924 = vadd.f32 0.0, %v923
      %v925 = vpop.f32.mrb[0].mxu0
      %926 = vmatprep.mubr.f32.mxu0 0.0
      %927 = vmatmul.mubr.f32.gmra.mrb[0].mxu0 %v794
      %v928 = vpop.f32.mrb[0].mxu0
      %v929 = vadd.f32 0.0, %v928
      %v930 = vpop.f32.mrb[0].mxu0
      %931 = vmatprep.mubr.f32.mxu0 0.0
      %932 = vmatmul.mubr.f32.gmra.mrb[0].mxu0 %v795
      %v933 = vpop.f32.mrb[0].mxu0
      %v934 = vadd.f32 0.0, %v933
      %v935 = vpop.f32.mrb[0].mxu0
      %936 = vmatprep.mubr.f32.mxu0 0.0
      %937 = vmatmul.mubr.f32.gmra.mrb[0].mxu0 %v796
      %v938 = vpop.f32.mrb[0].mxu0
      %v939 = vadd.f32 0.0, %v938
      %v940 = vpop.f32.mrb[0].mxu0
      %941 = vmatprep.mubr.f32.mxu0 0.0
      %942 = vmatmul.mubr.f32.gmra.mrb[0].mxu0 %v797
      %v943 = vpop.f32.mrb[0].mxu0
      %v944 = vadd.f32 0.0, %v943
      %v945 = vpop.f32.mrb[0].mxu0
      %946 = vmatprep.mubr.f32.mxu0 0.0
      %947 = vmatmul.mubr.f32.gmra.mrb[0].mxu0 %v798
      %v948 = vpop.f32.mrb[0].mxu0
      %v949 = vadd.f32 0.0, %v948
      %v950 = vpop.f32.mrb[0].mxu0
      %951 = vmatprep.mubr.f32.mxu0 0.0
      %952 = vmatmul.mubr.f32.gmra.mrb[0].mxu0 %v799
      %v953 = vpop.f32.mrb[0].mxu0
      %v954 = vadd.f32 0.0, %v953
      %v955 = vpop.f32.mrb[0].mxu0
      %956 = vmatprep.mubr.f32.mxu0 0.0
      %957 = vmatmul.mubr.f32.gmra.mrb[0].mxu0 %v800
      %v958 = vpop.f32.mrb[0].mxu0
      %v959 = vadd.f32 0.0, %v958
      %v960 = vpop.f32.mrb[0].mxu0
      %961 = vmatprep.mubr.f32.mxu0 0.0
      %962 = vmatmul.mubr.f32.gmra.mrb[0].mxu0 %v801
      %v963 = vpop.f32.mrb[0].mxu0
      %v964 = vadd.f32 0.0, %v963
      %v965 = vpop.f32.mrb[0].mxu0
      %966 = vmatprep.mubr.f32.mxu0 0.0
      %967 = vmatmul.mubr.f32.gmra.mrb[0].mxu0 %v802
      %v968 = vpop.f32.mrb[0].mxu0
      %v969 = vadd.f32 0.0, %v968
      %v970 = vpop.f32.mrb[0].mxu0
      %971 = vmatprep.mubr.f32.mxu0 0.0
      %972 = vmatmul.mubr.f32.gmra.mrb[0].mxu0 %v803
      %v973 = vpop.f32.mrb[0].mxu0
      %v974 = vadd.f32 0.0, %v973
      %v975 = vpop.f32.mrb[0].mxu0
      %976 = vmatprep.mubr.f32.mxu0 0.0
      %977 = vmatmul.mubr.f32.gmra.mrb[0].mxu0 %v804
      %v978 = vpop.f32.mrb[0].mxu0
      %v979 = vadd.f32 0.0, %v978
      %v980 = vpop.f32.mrb[0].mxu0
      %981 = vmatprep.mubr.f32.mxu0 0.0
      %982 = vmatmul.mubr.f32.gmra.mrb[0].mxu0 %v805
      %v983 = vpop.f32.mrb[0].mxu0
      %v984 = vadd.f32 0.0, %v983
      %v985 = vpop.f32.mrb[0].mxu0
      %986 = vmatprep.mubr.f32.mxu0 0.0
      %987 = vmatmul.mubr.f32.gmra.mrb[0].mxu0 %v806
      %v988 = vpop.f32.mrb[0].mxu0
      %v989 = vadd.f32 0.0, %v988
      %v990 = vpop.f32.mrb[0].mxu0
      %991 = vmatprep.mubr.f32.mxu0 0.0
      %992 = vmatmul.mubr.f32.gmra.mrb[0].mxu0 %v807
      %v993 = vpop.f32.mrb[0].mxu0
      %v994 = vadd.f32 0.0, %v993
      %v995 = vpop.f32.mrb[0].mxu0
      %996 = vmatprep.mubr.f32.mxu0 0.0
      %997 = vmatmul.mubr.f32.gmra.mrb[0].mxu0 %v808
      %v998 = vpop.f32.mrb[0].mxu0
      %v999 = vadd.f32 0.0, %v998
      %v1000 = vpop.f32.mrb[0].mxu0
      %1001 = vmatprep.mubr.f32.mxu0 0.0
      %1002 = vmatmul.mubr.f32.gmra.mrb[0].mxu0 %v809
      %v1003 = vpop.f32.mrb[0].mxu0
      %v1004 = vadd.f32 0.0, %v1003
      %v1005 = vpop.f32.mrb[0].mxu0
      %1006 = vmatprep.mubr.f32.mxu0 0.0
      %1007 = vmatmul.mubr.f32.gmra.mrb[0].mxu0 %v810
      %v1008 = vpop.f32.mrb[0].mxu0
      %v1009 = vadd.f32 0.0, %v1008
      %v1010 = vpop.f32.mrb[0].mxu0
      %1011 = vmatprep.mubr.f32.mxu0 0.0
      %1012 = vmatmul.mubr.f32.gmra.mrb[0].mxu0 %v811
      %v1013 = vpop.f32.mrb[0].mxu0
      %v1014 = vadd.f32 0.0, %v1013
      %v1015 = vpop.f32.mrb[0].mxu0
      %1016 = vmatprep.mubr.f32.mxu0 0.0
      %1017 = vmatmul.mubr.f32.gmra.mrb[0].mxu0 %v812
      %v1018 = vpop.f32.mrb[0].mxu0
      %v1019 = vadd.f32 0.0, %v1018
      %v1020 = vpop.f32.mrb[0].mxu0
      %1021 = vmatprep.mubr.f32.mxu0 0.0
      %1022 = vmatmul.mubr.f32.gmra.mrb[0].mxu0 %v813
      %v1023 = vpop.f32.mrb[0].mxu0
      %v1024 = vadd.f32 0.0, %v1023
      %v1025 = vpop.f32.mrb[0].mxu0
      %1026 = vmatprep.mubr.f32.mxu0 0.0
      %1027 = vmatmul.mubr.f32.gmra.mrb[0].mxu0 %v814
      %v1028 = vpop.f32.mrb[0].mxu0
      %v1029 = vadd.f32 0.0, %v1028
      %v1030 = vpop.f32.mrb[0].mxu0
      %1031 = vmatprep.mubr.f32.mxu0 0.0
      %1032 = vmatmul.mubr.f32.gmra.mrb[0].mxu0 %v815
      %v1033 = vpop.f32.mrb[0].mxu0
      %v1034 = vadd.f32 0.0, %v1033
      %v1035 = vpop.f32.mrb[0].mxu0
      %1036 = vmatprep.mubr.f32.mxu0 0.0
      %1037 = vmatmul.mubr.f32.gmra.mrb[0].mxu0 %v816
      %v1038 = vpop.f32.mrb[0].mxu0
      %v1039 = vadd.f32 0.0, %v1038
      %v1040 = vpop.f32.mrb[0].mxu0
      %1041 = vmatprep.mubr.f32.mxu0 0.0
      %1042 = vmatmul.mubr.f32.gmra.mrb[0].mxu0 %v817
      %v1043 = vpop.f32.mrb[0].mxu0
      %v1044 = vadd.f32 0.0, %v1043
      %v1045 = vpop.f32.mrb[0].mxu0
      %1046 = vmatprep.mubr.f32.mxu0 0.0
      %1047 = vmatmul.mubr.f32.gmra.mrb[0].mxu0 %v818
      %v1048 = vpop.f32.mrb[0].mxu0
      %v1049 = vadd.f32 0.0, %v1048
      %v1050 = vpop.f32.mrb[0].mxu0
      %1051 = vmatprep.mubr.f32.mxu0 0.0
      %1052 = vmatmul.mubr.f32.gmra.mrb[0].mxu0 %v819
      %v1053 = vpop.f32.mrb[0].mxu0
      %v1054 = vadd.f32 0.0, %v1053
      %v1055 = vpop.f32.mrb[0].mxu0
      %1056 = vmatprep.mubr.f32.mxu0 0.0
      %1057 = vmatmul.mubr.f32.gmra.mrb[0].mxu0 %v820
      %v1058 = vpop.f32.mrb[0].mxu0
      %v1059 = vadd.f32 0.0, %v1058
      %v1060 = vpop.f32.mrb[0].mxu0
      %1061 = vdwg.mxu0
      %1062 = vst [vmem:[%s145] sm:$0xff] %v904
      %1063 = vst [vmem:[%s145 + $0x8] sm:$0xff] %v909
      %1064 = vst [vmem:[%s145 + $0x10] sm:$0xff] %v914
      %1065 = vst [vmem:[%s145 + $0x18] sm:$0xff] %v919
      %1066 = vst [vmem:[%s145 + $0x20] sm:$0xff] %v924
      %1067 = vst [vmem:[%s145 + $0x28] sm:$0xff] %v929
      %1068 = vst [vmem:[%s145 + $0x30] sm:$0xff] %v934
      %1069 = vst [vmem:[%s145 + $0x38] sm:$0xff] %v939
      %1070 = vst [vmem:[%s145 + $0x40] sm:$0xff] %v944
      %1071 = vst [vmem:[%s145 + $0x48] sm:$0xff] %v949
      %1072 = vst [vmem:[%s145 + $0x50] sm:$0xff] %v954
      %1073 = vst [vmem:[%s145 + $0x58] sm:$0xff] %v959
      %1074 = vst [vmem:[%s145 + $0x60] sm:$0xff] %v964
      %1075 = vst [vmem:[%s145 + $0x68] sm:$0xff] %v969
      %1076 = vst [vmem:[%s145 + $0x70] sm:$0xff] %v974
      %1077 = vst [vmem:[%s145 + $0x78] sm:$0xff] %v979
      %1078 = vst [vmem:[%s145 + $0x80] sm:$0xff] %v984
      %1079 = vst [vmem:[%s145 + $0x88] sm:$0xff] %v989
      %1080 = vst [vmem:[%s145 + $0x90] sm:$0xff] %v994
      %1081 = vst [vmem:[%s145 + $0x98] sm:$0xff] %v999
      %1082 = vst [vmem:[%s145 + $0xa0] sm:$0xff] %v1004
      %1083 = vst [vmem:[%s145 + $0xa8] sm:$0xff] %v1009
      %1084 = vst [vmem:[%s145 + $0xb0] sm:$0xff] %v1014
      %1085 = vst [vmem:[%s145 + $0xb8] sm:$0xff] %v1019
      %1086 = vst [vmem:[%s145 + $0xc0] sm:$0xff] %v1024
      %1087 = vst [vmem:[%s145 + $0xc8] sm:$0xff] %v1029
      %1088 = vst [vmem:[%s145 + $0xd0] sm:$0xff] %v1034
      %1089 = vst [vmem:[%s145 + $0xd8] sm:$0xff] %v1039
      %1090 = vst [vmem:[%s145 + $0xe0] sm:$0xff] %v1044
      %1091 = vst [vmem:[%s145 + $0xe8] sm:$0xff] %v1049
      %1092 = vst [vmem:[%s145 + $0xf0] sm:$0xff] %v1054
      %1093 = vst [vmem:[%s145 + $0xf8] sm:$0xff] %v1059
      %v1094 = vadd.s32 %v147, 4294967292
      %v1095 = vadd.s32 %v148, 4294967292
      %v1096 = vadd.s32 %v149, 4294967292
      %v1097 = vadd.s32 %v150, 4294967292
      %v1098 = vadd.s32 %v151, 4294967292
      %v1099 = vadd.s32 %v152, 4294967292
      %v1100 = vadd.s32 %v153, 4294967292
      %v1101 = vadd.s32 %v154, 4294967292
      %v1102 = vadd.s32 %v155, 4294967292
      %v1103 = vadd.s32 %v156, 4294967292
      %v1104 = vadd.s32 %v157, 4294967292
      %v1105 = vadd.s32 %v158, 4294967292
      %v1106 = vadd.s32 %v159, 4294967292
      %v1107 = vadd.s32 %v160, 4294967292
      %v1108 = vadd.s32 %v161, 4294967292
      %v1109 = vadd.s32 %v162, 4294967292
      %v1110 = vadd.s32 %v163, 4294967292
      %v1111 = vadd.s32 %v164, 4294967292
      %v1112 = vadd.s32 %v165, 4294967292
      %v1113 = vadd.s32 %v166, 4294967292
      %v1114 = vadd.s32 %v167, 4294967292
      %v1115 = vadd.s32 %v168, 4294967292
      %v1116 = vadd.s32 %v169, 4294967292
      %v1117 = vadd.s32 %v170, 4294967292
      %v1118 = vadd.s32 %v171, 4294967292
      %v1119 = vadd.s32 %v172, 4294967292
      %v1120 = vadd.s32 %v173, 4294967292
      %v1121 = vadd.s32 %v174, 4294967292
      %v1122 = vadd.s32 %v175, 4294967292
      %v1123 = vadd.s32 %v176, 4294967292
      %v1124 = vadd.s32 %v177, 4294967292
      %v1125 = vadd.s32 %v178, 4294967292
      %1126 = vset.pattern.permute.xlu0 2
      %1127 = vperm.xlu0 %1126, %v1094
      %v1128 = vpop.permute.xlu0 %1127
      %1129 = vset.pattern.permute.xlu0 2
      %1130 = vperm.xlu0 %1129, %v1095
      %v1131 = vpop.permute.xlu0 %1130
      %1132 = vset.pattern.permute.xlu0 2
      %1133 = vperm.xlu0 %1132, %v1096
      %v1134 = vpop.permute.xlu0 %1133
      %1135 = vset.pattern.permute.xlu0 2
      %1136 = vperm.xlu0 %1135, %v1097
      %v1137 = vpop.permute.xlu0 %1136
      %1138 = vset.pattern.permute.xlu0 2
      %1139 = vperm.xlu0 %1138, %v1098
      %v1140 = vpop.permute.xlu0 %1139
      %1141 = vset.pattern.permute.xlu0 2
      %1142 = vperm.xlu0 %1141, %v1099
      %v1143 = vpop.permute.xlu0 %1142
      %1144 = vset.pattern.permute.xlu0 2
      %1145 = vperm.xlu0 %1144, %v1100
      %v1146 = vpop.permute.xlu0 %1145
      %1147 = vset.pattern.permute.xlu0 2
      %1148 = vperm.xlu0 %1147, %v1101
      %v1149 = vpop.permute.xlu0 %1148
      %1150 = vset.pattern.permute.xlu0 2
      %1151 = vperm.xlu0 %1150, %v1102
      %v1152 = vpop.permute.xlu0 %1151
      %1153 = vset.pattern.permute.xlu0 2
      %1154 = vperm.xlu0 %1153, %v1103
      %v1155 = vpop.permute.xlu0 %1154
      %1156 = vset.pattern.permute.xlu0 2
      %1157 = vperm.xlu0 %1156, %v1104
      %v1158 = vpop.permute.xlu0 %1157
      %1159 = vset.pattern.permute.xlu0 2
      %1160 = vperm.xlu0 %1159, %v1105
      %v1161 = vpop.permute.xlu0 %1160
      %1162 = vset.pattern.permute.xlu0 2
      %1163 = vperm.xlu0 %1162, %v1106
      %v1164 = vpop.permute.xlu0 %1163
      %1165 = vset.pattern.permute.xlu0 2
      %1166 = vperm.xlu0 %1165, %v1107
      %v1167 = vpop.permute.xlu0 %1166
      %1168 = vset.pattern.permute.xlu0 2
      %1169 = vperm.xlu0 %1168, %v1108
      %v1170 = vpop.permute.xlu0 %1169
      %1171 = vset.pattern.permute.xlu0 2
      %1172 = vperm.xlu0 %1171, %v1109
      %v1173 = vpop.permute.xlu0 %1172
      %1174 = vset.pattern.permute.xlu0 2
      %1175 = vperm.xlu0 %1174, %v1110
      %v1176 = vpop.permute.xlu0 %1175
      %1177 = vset.pattern.permute.xlu0 2
      %1178 = vperm.xlu0 %1177, %v1111
      %v1179 = vpop.permute.xlu0 %1178
      %1180 = vset.pattern.permute.xlu0 2
      %1181 = vperm.xlu0 %1180, %v1112
      %v1182 = vpop.permute.xlu0 %1181
      %1183 = vset.pattern.permute.xlu0 2
      %1184 = vperm.xlu0 %1183, %v1113
      %v1185 = vpop.permute.xlu0 %1184
      %1186 = vset.pattern.permute.xlu0 2
      %1187 = vperm.xlu0 %1186, %v1114
      %v1188 = vpop.permute.xlu0 %1187
      %1189 = vset.pattern.permute.xlu0 2
      %1190 = vperm.xlu0 %1189, %v1115
      %v1191 = vpop.permute.xlu0 %1190
      %1192 = vset.pattern.permute.xlu0 2
      %1193 = vperm.xlu0 %1192, %v1116
      %v1194 = vpop.permute.xlu0 %1193
      %1195 = vset.pattern.permute.xlu0 2
      %1196 = vperm.xlu0 %1195, %v1117
      %v1197 = vpop.permute.xlu0 %1196
      %1198 = vset.pattern.permute.xlu0 2
      %1199 = vperm.xlu0 %1198, %v1118
      %v1200 = vpop.permute.xlu0 %1199
      %1201 = vset.pattern.permute.xlu0 2
      %1202 = vperm.xlu0 %1201, %v1119
      %v1203 = vpop.permute.xlu0 %1202
      %1204 = vset.pattern.permute.xlu0 2
      %1205 = vperm.xlu0 %1204, %v1120
      %v1206 = vpop.permute.xlu0 %1205
      %1207 = vset.pattern.permute.xlu0 2
      %1208 = vperm.xlu0 %1207, %v1121
      %v1209 = vpop.permute.xlu0 %1208
      %1210 = vset.pattern.permute.xlu0 2
      %1211 = vperm.xlu0 %1210, %v1122
      %v1212 = vpop.permute.xlu0 %1211
      %1213 = vset.pattern.permute.xlu0 2
      %1214 = vperm.xlu0 %1213, %v1123
      %v1215 = vpop.permute.xlu0 %1214
      %1216 = vset.pattern.permute.xlu0 2
      %1217 = vperm.xlu0 %1216, %v1124
      %v1218 = vpop.permute.xlu0 %1217
      %1219 = vset.pattern.permute.xlu0 2
      %1220 = vperm.xlu0 %1219, %v1125
      %v1221 = vpop.permute.xlu0 %1220
      %vm1222 = vcmp.eq.s32.totalorder %v180, %v1128
      %vm1223 = vcmp.eq.s32.totalorder %v180, %v1131
      %vm1224 = vcmp.eq.s32.totalorder %v180, %v1134
      %vm1225 = vcmp.eq.s32.totalorder %v180, %v1137
      %vm1226 = vcmp.eq.s32.totalorder %v180, %v1140
      %vm1227 = vcmp.eq.s32.totalorder %v180, %v1143
      %vm1228 = vcmp.eq.s32.totalorder %v180, %v1146
      %vm1229 = vcmp.eq.s32.totalorder %v180, %v1149
      %vm1230 = vcmp.eq.s32.totalorder %v180, %v1152
      %vm1231 = vcmp.eq.s32.totalorder %v180, %v1155
      %vm1232 = vcmp.eq.s32.totalorder %v180, %v1158
      %vm1233 = vcmp.eq.s32.totalorder %v180, %v1161
      %vm1234 = vcmp.eq.s32.totalorder %v180, %v1164
      %vm1235 = vcmp.eq.s32.totalorder %v180, %v1167
      %vm1236 = vcmp.eq.s32.totalorder %v180, %v1170
      %vm1237 = vcmp.eq.s32.totalorder %v180, %v1173
      %vm1238 = vcmp.eq.s32.totalorder %v180, %v1176
      %vm1239 = vcmp.eq.s32.totalorder %v180, %v1179
      %vm1240 = vcmp.eq.s32.totalorder %v180, %v1182
      %vm1241 = vcmp.eq.s32.totalorder %v180, %v1185
      %vm1242 = vcmp.eq.s32.totalorder %v180, %v1188
      %vm1243 = vcmp.eq.s32.totalorder %v180, %v1191
      %vm1244 = vcmp.eq.s32.totalorder %v180, %v1194
      %vm1245 = vcmp.eq.s32.totalorder %v180, %v1197
      %vm1246 = vcmp.eq.s32.totalorder %v180, %v1200
      %vm1247 = vcmp.eq.s32.totalorder %v180, %v1203
      %vm1248 = vcmp.eq.s32.totalorder %v180, %v1206
      %vm1249 = vcmp.eq.s32.totalorder %v180, %v1209
      %vm1250 = vcmp.eq.s32.totalorder %v180, %v1212
      %vm1251 = vcmp.eq.s32.totalorder %v180, %v1215
      %vm1252 = vcmp.eq.s32.totalorder %v180, %v1218
      %vm1253 = vcmp.eq.s32.totalorder %v180, %v1221
      %v1254 = vsel %vm1222, 1, 0
      %v1255 = vsel %vm1223, 1, 0
      %v1256 = vsel %vm1224, 1, 0
      %v1257 = vsel %vm1225, 1, 0
      %v1258 = vsel %vm1226, 1, 0
      %v1259 = vsel %vm1227, 1, 0
      %v1260 = vsel %vm1228, 1, 0
      %v1261 = vsel %vm1229, 1, 0
      %v1262 = vsel %vm1230, 1, 0
      %v1263 = vsel %vm1231, 1, 0
      %v1264 = vsel %vm1232, 1, 0
      %v1265 = vsel %vm1233, 1, 0
      %v1266 = vsel %vm1234, 1, 0
      %v1267 = vsel %vm1235, 1, 0
      %v1268 = vsel %vm1236, 1, 0
      %v1269 = vsel %vm1237, 1, 0
      %v1270 = vsel %vm1238, 1, 0
      %v1271 = vsel %vm1239, 1, 0
      %v1272 = vsel %vm1240, 1, 0
      %v1273 = vsel %vm1241, 1, 0
      %v1274 = vsel %vm1242, 1, 0
      %v1275 = vsel %vm1243, 1, 0
      %v1276 = vsel %vm1244, 1, 0
      %v1277 = vsel %vm1245, 1, 0
      %v1278 = vsel %vm1246, 1, 0
      %v1279 = vsel %vm1247, 1, 0
      %v1280 = vsel %vm1248, 1, 0
      %v1281 = vsel %vm1249, 1, 0
      %v1282 = vsel %vm1250, 1, 0
      %v1283 = vsel %vm1251, 1, 0
      %v1284 = vsel %vm1252, 1, 0
      %v1285 = vsel %vm1253, 1, 0
      %v1286 = vadd.s32 %v147, 8
      %v1287 = vadd.s32 %v148, 8
      %v1288 = vadd.s32 %v149, 8
      %v1289 = vadd.s32 %v150, 8
      %v1290 = vadd.s32 %v151, 8
      %v1291 = vadd.s32 %v152, 8
      %v1292 = vadd.s32 %v153, 8
      %v1293 = vadd.s32 %v154, 8
      %v1294 = vadd.s32 %v155, 8
      %v1295 = vadd.s32 %v156, 8
      %v1296 = vadd.s32 %v157, 8
      %v1297 = vadd.s32 %v158, 8
      %v1298 = vadd.s32 %v159, 8
      %v1299 = vadd.s32 %v160, 8
      %v1300 = vadd.s32 %v161, 8
      %v1301 = vadd.s32 %v162, 8
      %v1302 = vadd.s32 %v163, 8
      %v1303 = vadd.s32 %v164, 8
      %v1304 = vadd.s32 %v165, 8
      %v1305 = vadd.s32 %v166, 8
      %v1306 = vadd.s32 %v167, 8
      %v1307 = vadd.s32 %v168, 8
      %v1308 = vadd.s32 %v169, 8
      %v1309 = vadd.s32 %v170, 8
      %v1310 = vadd.s32 %v171, 8
      %v1311 = vadd.s32 %v172, 8
      %v1312 = vadd.s32 %v173, 8
      %v1313 = vadd.s32 %v174, 8
      %v1314 = vadd.s32 %v175, 8
      %v1315 = vadd.s32 %v176, 8
      %v1316 = vadd.s32 %v177, 8
      %v1317 = vadd.s32 %v178, 8
      %1318 = vset.pattern.permute.xlu0 3
      %1319 = vperm.xlu0 %1318, %v1286
      %v1320 = vpop.permute.xlu0 %1319
      %1321 = vset.pattern.permute.xlu0 3
      %1322 = vperm.xlu0 %1321, %v1287
      %v1323 = vpop.permute.xlu0 %1322
      %1324 = vset.pattern.permute.xlu0 3
      %1325 = vperm.xlu0 %1324, %v1288
      %v1326 = vpop.permute.xlu0 %1325
      %1327 = vset.pattern.permute.xlu0 3
      %1328 = vperm.xlu0 %1327, %v1289
      %v1329 = vpop.permute.xlu0 %1328
      %1330 = vset.pattern.permute.xlu0 3
      %1331 = vperm.xlu0 %1330, %v1290
      %v1332 = vpop.permute.xlu0 %1331
      %1333 = vset.pattern.permute.xlu0 3
      %1334 = vperm.xlu0 %1333, %v1291
      %v1335 = vpop.permute.xlu0 %1334
      %1336 = vset.pattern.permute.xlu0 3
      %1337 = vperm.xlu0 %1336, %v1292
      %v1338 = vpop.permute.xlu0 %1337
      %1339 = vset.pattern.permute.xlu0 3
      %1340 = vperm.xlu0 %1339, %v1293
      %v1341 = vpop.permute.xlu0 %1340
      %1342 = vset.pattern.permute.xlu0 3
      %1343 = vperm.xlu0 %1342, %v1294
      %v1344 = vpop.permute.xlu0 %1343
      %1345 = vset.pattern.permute.xlu0 3
      %1346 = vperm.xlu0 %1345, %v1295
      %v1347 = vpop.permute.xlu0 %1346
      %1348 = vset.pattern.permute.xlu0 3
      %1349 = vperm.xlu0 %1348, %v1296
      %v1350 = vpop.permute.xlu0 %1349
      %1351 = vset.pattern.permute.xlu0 3
      %1352 = vperm.xlu0 %1351, %v1297
      %v1353 = vpop.permute.xlu0 %1352
      %1354 = vset.pattern.permute.xlu0 3
      %1355 = vperm.xlu0 %1354, %v1298
      %v1356 = vpop.permute.xlu0 %1355
      %1357 = vset.pattern.permute.xlu0 3
      %1358 = vperm.xlu0 %1357, %v1299
      %v1359 = vpop.permute.xlu0 %1358
      %1360 = vset.pattern.permute.xlu0 3
      %1361 = vperm.xlu0 %1360, %v1300
      %v1362 = vpop.permute.xlu0 %1361
      %1363 = vset.pattern.permute.xlu0 3
      %1364 = vperm.xlu0 %1363, %v1301
      %v1365 = vpop.permute.xlu0 %1364
      %1366 = vset.pattern.permute.xlu0 3
      %1367 = vperm.xlu0 %1366, %v1302
      %v1368 = vpop.permute.xlu0 %1367
      %1369 = vset.pattern.permute.xlu0 3
      %1370 = vperm.xlu0 %1369, %v1303
      %v1371 = vpop.permute.xlu0 %1370
      %1372 = vset.pattern.permute.xlu0 3
      %1373 = vperm.xlu0 %1372, %v1304
      %v1374 = vpop.permute.xlu0 %1373
      %1375 = vset.pattern.permute.xlu0 3
      %1376 = vperm.xlu0 %1375, %v1305
      %v1377 = vpop.permute.xlu0 %1376
      %1378 = vset.pattern.permute.xlu0 3
      %1379 = vperm.xlu0 %1378, %v1306
      %v1380 = vpop.permute.xlu0 %1379
      %1381 = vset.pattern.permute.xlu0 3
      %1382 = vperm.xlu0 %1381, %v1307
      %v1383 = vpop.permute.xlu0 %1382
      %1384 = vset.pattern.permute.xlu0 3
      %1385 = vperm.xlu0 %1384, %v1308
      %v1386 = vpop.permute.xlu0 %1385
      %1387 = vset.pattern.permute.xlu0 3
      %1388 = vperm.xlu0 %1387, %v1309
      %v1389 = vpop.permute.xlu0 %1388
      %1390 = vset.pattern.permute.xlu0 3
      %1391 = vperm.xlu0 %1390, %v1310
      %v1392 = vpop.permute.xlu0 %1391
      %1393 = vset.pattern.permute.xlu0 3
      %1394 = vperm.xlu0 %1393, %v1311
      %v1395 = vpop.permute.xlu0 %1394
      %1396 = vset.pattern.permute.xlu0 3
      %1397 = vperm.xlu0 %1396, %v1312
      %v1398 = vpop.permute.xlu0 %1397
      %1399 = vset.pattern.permute.xlu0 3
      %1400 = vperm.xlu0 %1399, %v1313
      %v1401 = vpop.permute.xlu0 %1400
      %1402 = vset.pattern.permute.xlu0 3
      %1403 = vperm.xlu0 %1402, %v1314
      %v1404 = vpop.permute.xlu0 %1403
      %1405 = vset.pattern.permute.xlu0 3
      %1406 = vperm.xlu0 %1405, %v1315
      %v1407 = vpop.permute.xlu0 %1406
      %1408 = vset.pattern.permute.xlu0 3
      %1409 = vperm.xlu0 %1408, %v1316
      %v1410 = vpop.permute.xlu0 %1409
      %1411 = vset.pattern.permute.xlu0 3
      %1412 = vperm.xlu0 %1411, %v1317
      %v1413 = vpop.permute.xlu0 %1412
      %vm1414 = vcmp.eq.s32.totalorder %v180, %v1320
      %vm1415 = vcmp.eq.s32.totalorder %v180, %v1323
      %vm1416 = vcmp.eq.s32.totalorder %v180, %v1326
      %vm1417 = vcmp.eq.s32.totalorder %v180, %v1329
      %vm1418 = vcmp.eq.s32.totalorder %v180, %v1332
      %vm1419 = vcmp.eq.s32.totalorder %v180, %v1335
      %vm1420 = vcmp.eq.s32.totalorder %v180, %v1338
      %vm1421 = vcmp.eq.s32.totalorder %v180, %v1341
      %vm1422 = vcmp.eq.s32.totalorder %v180, %v1344
      %vm1423 = vcmp.eq.s32.totalorder %v180, %v1347
      %vm1424 = vcmp.eq.s32.totalorder %v180, %v1350
      %vm1425 = vcmp.eq.s32.totalorder %v180, %v1353
      %vm1426 = vcmp.eq.s32.totalorder %v180, %v1356
      %vm1427 = vcmp.eq.s32.totalorder %v180, %v1359
      %vm1428 = vcmp.eq.s32.totalorder %v180, %v1362
      %vm1429 = vcmp.eq.s32.totalorder %v180, %v1365
      %vm1430 = vcmp.eq.s32.totalorder %v180, %v1368
      %vm1431 = vcmp.eq.s32.totalorder %v180, %v1371
      %vm1432 = vcmp.eq.s32.totalorder %v180, %v1374
      %vm1433 = vcmp.eq.s32.totalorder %v180, %v1377
      %vm1434 = vcmp.eq.s32.totalorder %v180, %v1380
      %vm1435 = vcmp.eq.s32.totalorder %v180, %v1383
      %vm1436 = vcmp.eq.s32.totalorder %v180, %v1386
      %vm1437 = vcmp.eq.s32.totalorder %v180, %v1389
      %vm1438 = vcmp.eq.s32.totalorder %v180, %v1392
      %vm1439 = vcmp.eq.s32.totalorder %v180, %v1395
      %vm1440 = vcmp.eq.s32.totalorder %v180, %v1398
      %vm1441 = vcmp.eq.s32.totalorder %v180, %v1401
      %vm1442 = vcmp.eq.s32.totalorder %v180, %v1404
      %vm1443 = vcmp.eq.s32.totalorder %v180, %v1407
      %vm1444 = vcmp.eq.s32.totalorder %v180, %v1410
      %vm1445 = vcmp.eq.s32.totalorder %v180, %v1413
      %v1446 = vsel %vm1414, 1, 0
      %v1447 = vsel %vm1415, 1, 0
      %v1448 = vsel %vm1416, 1, 0
      %v1449 = vsel %vm1417, 1, 0
      %v1450 = vsel %vm1418, 1, 0
      %v1451 = vsel %vm1419, 1, 0
      %v1452 = vsel %vm1420, 1, 0
      %v1453 = vsel %vm1421, 1, 0
      %v1454 = vsel %vm1422, 1, 0
      %v1455 = vsel %vm1423, 1, 0
      %v1456 = vsel %vm1424, 1, 0
      %v1457 = vsel %vm1425, 1, 0
      %v1458 = vsel %vm1426, 1, 0
      %v1459 = vsel %vm1427, 1, 0
      %v1460 = vsel %vm1428, 1, 0
      %v1461 = vsel %vm1429, 1, 0
      %v1462 = vsel %vm1430, 1, 0
      %v1463 = vsel %vm1431, 1, 0
      %v1464 = vsel %vm1432, 1, 0
      %v1465 = vsel %vm1433, 1, 0
      %v1466 = vsel %vm1434, 1, 0
      %v1467 = vsel %vm1435, 1, 0
      %v1468 = vsel %vm1436, 1, 0
      %v1469 = vsel %vm1437, 1, 0
      %v1470 = vsel %vm1438, 1, 0
      %v1471 = vsel %vm1439, 1, 0
      %v1472 = vsel %vm1440, 1, 0
      %v1473 = vsel %vm1441, 1, 0
      %v1474 = vsel %vm1442, 1, 0
      %v1475 = vsel %vm1443, 1, 0
      %v1476 = vsel %vm1444, 1, 0
      %v1477 = vsel %vm1445, 1, 0
      %v1478 = vadd.s32 %v1254, %v1446
      %v1479 = vadd.s32 %v1255, %v1447
      %v1480 = vadd.s32 %v1256, %v1448
      %v1481 = vadd.s32 %v1257, %v1449
      %v1482 = vadd.s32 %v1258, %v1450
      %v1483 = vadd.s32 %v1259, %v1451
      %v1484 = vadd.s32 %v1260, %v1452
      %v1485 = vadd.s32 %v1261, %v1453
      %v1486 = vadd.s32 %v1262, %v1454
      %v1487 = vadd.s32 %v1263, %v1455
      %v1488 = vadd.s32 %v1264, %v1456
      %v1489 = vadd.s32 %v1265, %v1457
      %v1490 = vadd.s32 %v1266, %v1458
      %v1491 = vadd.s32 %v1267, %v1459
      %v1492 = vadd.s32 %v1268, %v1460
      %v1493 = vadd.s32 %v1269, %v1461
      %v1494 = vadd.s32 %v1270, %v1462
      %v1495 = vadd.s32 %v1271, %v1463
      %v1496 = vadd.s32 %v1272, %v1464
      %v1497 = vadd.s32 %v1273, %v1465
      %v1498 = vadd.s32 %v1274, %v1466
      %v1499 = vadd.s32 %v1275, %v1467
      %v1500 = vadd.s32 %v1276, %v1468
      %v1501 = vadd.s32 %v1277, %v1469
      %v1502 = vadd.s32 %v1278, %v1470
      %v1503 = vadd.s32 %v1279, %v1471
      %v1504 = vadd.s32 %v1280, %v1472
      %v1505 = vadd.s32 %v1281, %v1473
      %v1506 = vadd.s32 %v1282, %v1474
      %v1507 = vadd.s32 %v1283, %v1475
      %v1508 = vadd.s32 %v1284, %v1476
      %v1509 = vadd.s32 %v1285, %v1477
      %v1510 = vadd.s32 %v147, 20
      %v1511 = vadd.s32 %v148, 20
      %v1512 = vadd.s32 %v149, 20
      %v1513 = vadd.s32 %v150, 20
      %v1514 = vadd.s32 %v151, 20
      %v1515 = vadd.s32 %v152, 20
      %v1516 = vadd.s32 %v153, 20
      %v1517 = vadd.s32 %v154, 20
      %v1518 = vadd.s32 %v155, 20
      %v1519 = vadd.s32 %v156, 20
      %v1520 = vadd.s32 %v157, 20
      %v1521 = vadd.s32 %v158, 20
      %v1522 = vadd.s32 %v159, 20
      %v1523 = vadd.s32 %v160, 20
      %v1524 = vadd.s32 %v161, 20
      %v1525 = vadd.s32 %v162, 20
      %v1526 = vadd.s32 %v163, 20
      %v1527 = vadd.s32 %v164, 20
      %v1528 = vadd.s32 %v165, 20
      %v1529 = vadd.s32 %v166, 20
      %v1530 = vadd.s32 %v167, 20
      %v1531 = vadd.s32 %v168, 20
      %v1532 = vadd.s32 %v169, 20
      %v1533 = vadd.s32 %v170, 20
      %v1534 = vadd.s32 %v171, 20
      %v1535 = vadd.s32 %v172, 20
      %v1536 = vadd.s32 %v173, 20
      %v1537 = vadd.s32 %v174, 20
      %v1538 = vadd.s32 %v175, 20
      %v1539 = vadd.s32 %v176, 20
      %v1540 = vadd.s32 %v177, 20
      %v1541 = vadd.s32 %v178, 20
      %1542 = vset.pattern.permute.xlu0 4
      %1543 = vperm.xlu0 %1542, %v1510
      %v1544 = vpop.permute.xlu0 %1543
      %1545 = vset.pattern.permute.xlu0 4
      %1546 = vperm.xlu0 %1545, %v1511
      %v1547 = vpop.permute.xlu0 %1546
      %1548 = vset.pattern.permute.xlu0 4
      %1549 = vperm.xlu0 %1548, %v1512
      %v1550 = vpop.permute.xlu0 %1549
      %1551 = vset.pattern.permute.xlu0 4
      %1552 = vperm.xlu0 %1551, %v1513
      %v1553 = vpop.permute.xlu0 %1552
      %1554 = vset.pattern.permute.xlu0 4
      %1555 = vperm.xlu0 %1554, %v1514
      %v1556 = vpop.permute.xlu0 %1555
      %1557 = vset.pattern.permute.xlu0 4
      %1558 = vperm.xlu0 %1557, %v1515
      %v1559 = vpop.permute.xlu0 %1558
      %1560 = vset.pattern.permute.xlu0 4
      %1561 = vperm.xlu0 %1560, %v1516
      %v1562 = vpop.permute.xlu0 %1561
      %1563 = vset.pattern.permute.xlu0 4
      %1564 = vperm.xlu0 %1563, %v1517
      %v1565 = vpop.permute.xlu0 %1564
      %1566 = vset.pattern.permute.xlu0 4
      %1567 = vperm.xlu0 %1566, %v1518
      %v1568 = vpop.permute.xlu0 %1567
      %1569 = vset.pattern.permute.xlu0 4
      %1570 = vperm.xlu0 %1569, %v1519
      %v1571 = vpop.permute.xlu0 %1570
      %1572 = vset.pattern.permute.xlu0 4
      %1573 = vperm.xlu0 %1572, %v1520
      %v1574 = vpop.permute.xlu0 %1573
      %1575 = vset.pattern.permute.xlu0 4
      %1576 = vperm.xlu0 %1575, %v1521
      %v1577 = vpop.permute.xlu0 %1576
      %1578 = vset.pattern.permute.xlu0 4
      %1579 = vperm.xlu0 %1578, %v1522
      %v1580 = vpop.permute.xlu0 %1579
      %1581 = vset.pattern.permute.xlu0 4
      %1582 = vperm.xlu0 %1581, %v1523
      %v1583 = vpop.permute.xlu0 %1582
      %1584 = vset.pattern.permute.xlu0 4
      %1585 = vperm.xlu0 %1584, %v1524
      %v1586 = vpop.permute.xlu0 %1585
      %1587 = vset.pattern.permute.xlu0 4
      %1588 = vperm.xlu0 %1587, %v1525
      %v1589 = vpop.permute.xlu0 %1588
      %1590 = vset.pattern.permute.xlu0 4
      %1591 = vperm.xlu0 %1590, %v1526
      %v1592 = vpop.permute.xlu0 %1591
      %1593 = vset.pattern.permute.xlu0 4
      %1594 = vperm.xlu0 %1593, %v1527
      %v1595 = vpop.permute.xlu0 %1594
      %1596 = vset.pattern.permute.xlu0 4
      %1597 = vperm.xlu0 %1596, %v1528
      %v1598 = vpop.permute.xlu0 %1597
      %1599 = vset.pattern.permute.xlu0 4
      %1600 = vperm.xlu0 %1599, %v1529
      %v1601 = vpop.permute.xlu0 %1600
      %1602 = vset.pattern.permute.xlu0 4
      %1603 = vperm.xlu0 %1602, %v1530
      %v1604 = vpop.permute.xlu0 %1603
      %1605 = vset.pattern.permute.xlu0 4
      %1606 = vperm.xlu0 %1605, %v1531
      %v1607 = vpop.permute.xlu0 %1606
      %1608 = vset.pattern.permute.xlu0 4
      %1609 = vperm.xlu0 %1608, %v1532
      %v1610 = vpop.permute.xlu0 %1609
      %1611 = vset.pattern.permute.xlu0 4
      %1612 = vperm.xlu0 %1611, %v1533
      %v1613 = vpop.permute.xlu0 %1612
      %1614 = vset.pattern.permute.xlu0 4
      %1615 = vperm.xlu0 %1614, %v1534
      %v1616 = vpop.permute.xlu0 %1615
      %1617 = vset.pattern.permute.xlu0 4
      %1618 = vperm.xlu0 %1617, %v1535
      %v1619 = vpop.permute.xlu0 %1618
      %1620 = vset.pattern.permute.xlu0 4
      %1621 = vperm.xlu0 %1620, %v1536
      %v1622 = vpop.permute.xlu0 %1621
      %1623 = vset.pattern.permute.xlu0 4
      %1624 = vperm.xlu0 %1623, %v1537
      %v1625 = vpop.permute.xlu0 %1624
      %1626 = vset.pattern.permute.xlu0 4
      %1627 = vperm.xlu0 %1626, %v1538
      %v1628 = vpop.permute.xlu0 %1627
      %1629 = vset.pattern.permute.xlu0 4
      %1630 = vperm.xlu0 %1629, %v1539
      %v1631 = vpop.permute.xlu0 %1630
      %1632 = vset.pattern.permute.xlu0 4
      %1633 = vperm.xlu0 %1632, %v1540
      %v1634 = vpop.permute.xlu0 %1633
      %1635 = vset.pattern.permute.xlu0 4
      %1636 = vperm.xlu0 %1635, %v1541
      %v1637 = vpop.permute.xlu0 %1636
      %vm1638 = vcmp.eq.s32.totalorder %v180, %v1544
      %vm1639 = vcmp.eq.s32.totalorder %v180, %v1547
      %vm1640 = vcmp.eq.s32.totalorder %v180, %v1550
      %vm1641 = vcmp.eq.s32.totalorder %v180, %v1553
      %vm1642 = vcmp.eq.s32.totalorder %v180, %v1556
      %vm1643 = vcmp.eq.s32.totalorder %v180, %v1559
      %vm1644 = vcmp.eq.s32.totalorder %v180, %v1562
      %vm1645 = vcmp.eq.s32.totalorder %v180, %v1565
      %vm1646 = vcmp.eq.s32.totalorder %v180, %v1568
      %vm1647 = vcmp.eq.s32.totalorder %v180, %v1571
      %vm1648 = vcmp.eq.s32.totalorder %v180, %v1574
      %vm1649 = vcmp.eq.s32.totalorder %v180, %v1577
      %vm1650 = vcmp.eq.s32.totalorder %v180, %v1580
      %vm1651 = vcmp.eq.s32.totalorder %v180, %v1583
      %vm1652 = vcmp.eq.s32.totalorder %v180, %v1586
      %vm1653 = vcmp.eq.s32.totalorder %v180, %v1589
      %vm1654 = vcmp.eq.s32.totalorder %v180, %v1592
      %vm1655 = vcmp.eq.s32.totalorder %v180, %v1595
      %vm1656 = vcmp.eq.s32.totalorder %v180, %v1598
      %vm1657 = vcmp.eq.s32.totalorder %v180, %v1601
      %vm1658 = vcmp.eq.s32.totalorder %v180, %v1604
      %vm1659 = vcmp.eq.s32.totalorder %v180, %v1607
      %vm1660 = vcmp.eq.s32.totalorder %v180, %v1610
      %vm1661 = vcmp.eq.s32.totalorder %v180, %v1613
      %vm1662 = vcmp.eq.s32.totalorder %v180, %v1616
      %vm1663 = vcmp.eq.s32.totalorder %v180, %v1619
      %vm1664 = vcmp.eq.s32.totalorder %v180, %v1622
      %vm1665 = vcmp.eq.s32.totalorder %v180, %v1625
      %vm1666 = vcmp.eq.s32.totalorder %v180, %v1628
      %vm1667 = vcmp.eq.s32.totalorder %v180, %v1631
      %vm1668 = vcmp.eq.s32.totalorder %v180, %v1634
      %vm1669 = vcmp.eq.s32.totalorder %v180, %v1637
      %v1670 = vsel %vm1638, 1, 0
      %v1671 = vsel %vm1639, 1, 0
      %v1672 = vsel %vm1640, 1, 0
      %v1673 = vsel %vm1641, 1, 0
      %v1674 = vsel %vm1642, 1, 0
      %v1675 = vsel %vm1643, 1, 0
      %v1676 = vsel %vm1644, 1, 0
      %v1677 = vsel %vm1645, 1, 0
      %v1678 = vsel %vm1646, 1, 0
      %v1679 = vsel %vm1647, 1, 0
      %v1680 = vsel %vm1648, 1, 0
      %v1681 = vsel %vm1649, 1, 0
      %v1682 = vsel %vm1650, 1, 0
      %v1683 = vsel %vm1651, 1, 0
      %v1684 = vsel %vm1652, 1, 0
      %v1685 = vsel %vm1653, 1, 0
      %v1686 = vsel %vm1654, 1, 0
      %v1687 = vsel %vm1655, 1, 0
      %v1688 = vsel %vm1656, 1, 0
      %v1689 = vsel %vm1657, 1, 0
      %v1690 = vsel %vm1658, 1, 0
      %v1691 = vsel %vm1659, 1, 0
      %v1692 = vsel %vm1660, 1, 0
      %v1693 = vsel %vm1661, 1, 0
      %v1694 = vsel %vm1662, 1, 0
      %v1695 = vsel %vm1663, 1, 0
      %v1696 = vsel %vm1664, 1, 0
      %v1697 = vsel %vm1665, 1, 0
      %v1698 = vsel %vm1666, 1, 0
      %v1699 = vsel %vm1667, 1, 0
      %v1700 = vsel %vm1668, 1, 0
      %v1701 = vsel %vm1669, 1, 0
      %v1702 = vadd.s32 %v1478, %v1670
      %v1703 = vadd.s32 %v1479, %v1671
      %v1704 = vadd.s32 %v1480, %v1672
      %v1705 = vadd.s32 %v1481, %v1673
      %v1706 = vadd.s32 %v1482, %v1674
      %v1707 = vadd.s32 %v1483, %v1675
      %v1708 = vadd.s32 %v1484, %v1676
      %v1709 = vadd.s32 %v1485, %v1677
      %v1710 = vadd.s32 %v1486, %v1678
      %v1711 = vadd.s32 %v1487, %v1679
      %v1712 = vadd.s32 %v1488, %v1680
      %v1713 = vadd.s32 %v1489, %v1681
      %v1714 = vadd.s32 %v1490, %v1682
      %v1715 = vadd.s32 %v1491, %v1683
      %v1716 = vadd.s32 %v1492, %v1684
      %v1717 = vadd.s32 %v1493, %v1685
      %v1718 = vadd.s32 %v1494, %v1686
      %v1719 = vadd.s32 %v1495, %v1687
      %v1720 = vadd.s32 %v1496, %v1688
      %v1721 = vadd.s32 %v1497, %v1689
      %v1722 = vadd.s32 %v1498, %v1690
      %v1723 = vadd.s32 %v1499, %v1691
      %v1724 = vadd.s32 %v1500, %v1692
      %v1725 = vadd.s32 %v1501, %v1693
      %v1726 = vadd.s32 %v1502, %v1694
      %v1727 = vadd.s32 %v1503, %v1695
      %v1728 = vadd.s32 %v1504, %v1696
      %v1729 = vadd.s32 %v1505, %v1697
      %v1730 = vadd.s32 %v1506, %v1698
      %v1731 = vadd.s32 %v1507, %v1699
      %v1732 = vadd.s32 %v1508, %v1700
      %v1733 = vadd.s32 %v1509, %v1701
      %v1734 = vadd.s32 %v147, 30
      %v1735 = vadd.s32 %v148, 30
      %v1736 = vadd.s32 %v149, 30
      %v1737 = vadd.s32 %v150, 30
      %v1738 = vadd.s32 %v151, 30
      %v1739 = vadd.s32 %v152, 30
      %v1740 = vadd.s32 %v153, 30
      %v1741 = vadd.s32 %v154, 30
      %v1742 = vadd.s32 %v155, 30
      %v1743 = vadd.s32 %v156, 30
      %v1744 = vadd.s32 %v157, 30
      %v1745 = vadd.s32 %v158, 30
      %v1746 = vadd.s32 %v159, 30
      %v1747 = vadd.s32 %v160, 30
      %v1748 = vadd.s32 %v161, 30
      %v1749 = vadd.s32 %v162, 30
      %v1750 = vadd.s32 %v163, 30
      %v1751 = vadd.s32 %v164, 30
      %v1752 = vadd.s32 %v165, 30
      %v1753 = vadd.s32 %v166, 30
      %v1754 = vadd.s32 %v167, 30
      %v1755 = vadd.s32 %v168, 30
      %v1756 = vadd.s32 %v169, 30
      %v1757 = vadd.s32 %v170, 30
      %v1758 = vadd.s32 %v171, 30
      %v1759 = vadd.s32 %v172, 30
      %v1760 = vadd.s32 %v173, 30
      %v1761 = vadd.s32 %v174, 30
      %v1762 = vadd.s32 %v175, 30
      %v1763 = vadd.s32 %v176, 30
      %v1764 = vadd.s32 %v177, 30
      %v1765 = vadd.s32 %v178, 30
      %1766 = vset.pattern.permute.xlu0 5
      %1767 = vperm.xlu0 %1766, %v1734
      %v1768 = vpop.permute.xlu0 %1767
      %1769 = vset.pattern.permute.xlu0 5
      %1770 = vperm.xlu0 %1769, %v1735
      %v1771 = vpop.permute.xlu0 %1770
      %1772 = vset.pattern.permute.xlu0 5
      %1773 = vperm.xlu0 %1772, %v1736
      %v1774 = vpop.permute.xlu0 %1773
      %1775 = vset.pattern.permute.xlu0 5
      %1776 = vperm.xlu0 %1775, %v1737
      %v1777 = vpop.permute.xlu0 %1776
      %1778 = vset.pattern.permute.xlu0 5
      %1779 = vperm.xlu0 %1778, %v1738
      %v1780 = vpop.permute.xlu0 %1779
      %1781 = vset.pattern.permute.xlu0 5
      %1782 = vperm.xlu0 %1781, %v1739
      %v1783 = vpop.permute.xlu0 %1782
      %1784 = vset.pattern.permute.xlu0 5
      %1785 = vperm.xlu0 %1784, %v1740
      %v1786 = vpop.permute.xlu0 %1785
      %1787 = vset.pattern.permute.xlu0 5
      %1788 = vperm.xlu0 %1787, %v1741
      %v1789 = vpop.permute.xlu0 %1788
      %1790 = vset.pattern.permute.xlu0 5
      %1791 = vperm.xlu0 %1790, %v1742
      %v1792 = vpop.permute.xlu0 %1791
      %1793 = vset.pattern.permute.xlu0 5
      %1794 = vperm.xlu0 %1793, %v1743
      %v1795 = vpop.permute.xlu0 %1794
      %1796 = vset.pattern.permute.xlu0 5
      %1797 = vperm.xlu0 %1796, %v1744
      %v1798 = vpop.permute.xlu0 %1797
      %1799 = vset.pattern.permute.xlu0 5
      %1800 = vperm.xlu0 %1799, %v1745
      %v1801 = vpop.permute.xlu0 %1800
      %1802 = vset.pattern.permute.xlu0 5
      %1803 = vperm.xlu0 %1802, %v1746
      %v1804 = vpop.permute.xlu0 %1803
      %1805 = vset.pattern.permute.xlu0 5
      %1806 = vperm.xlu0 %1805, %v1747
      %v1807 = vpop.permute.xlu0 %1806
      %1808 = vset.pattern.permute.xlu0 5
      %1809 = vperm.xlu0 %1808, %v1748
      %v1810 = vpop.permute.xlu0 %1809
      %1811 = vset.pattern.permute.xlu0 5
      %1812 = vperm.xlu0 %1811, %v1749
      %v1813 = vpop.permute.xlu0 %1812
      %1814 = vset.pattern.permute.xlu0 5
      %1815 = vperm.xlu0 %1814, %v1750
      %v1816 = vpop.permute.xlu0 %1815
      %1817 = vset.pattern.permute.xlu0 5
      %1818 = vperm.xlu0 %1817, %v1751
      %v1819 = vpop.permute.xlu0 %1818
      %1820 = vset.pattern.permute.xlu0 5
      %1821 = vperm.xlu0 %1820, %v1752
      %v1822 = vpop.permute.xlu0 %1821
      %1823 = vset.pattern.permute.xlu0 5
      %1824 = vperm.xlu0 %1823, %v1753
      %v1825 = vpop.permute.xlu0 %1824
      %1826 = vset.pattern.permute.xlu0 5
      %1827 = vperm.xlu0 %1826, %v1754
      %v1828 = vpop.permute.xlu0 %1827
      %1829 = vset.pattern.permute.xlu0 5
      %1830 = vperm.xlu0 %1829, %v1755
      %v1831 = vpop.permute.xlu0 %1830
      %1832 = vset.pattern.permute.xlu0 5
      %1833 = vperm.xlu0 %1832, %v1756
      %v1834 = vpop.permute.xlu0 %1833
      %1835 = vset.pattern.permute.xlu0 5
      %1836 = vperm.xlu0 %1835, %v1757
      %v1837 = vpop.permute.xlu0 %1836
      %1838 = vset.pattern.permute.xlu0 5
      %1839 = vperm.xlu0 %1838, %v1758
      %v1840 = vpop.permute.xlu0 %1839
      %1841 = vset.pattern.permute.xlu0 5
      %1842 = vperm.xlu0 %1841, %v1759
      %v1843 = vpop.permute.xlu0 %1842
      %1844 = vset.pattern.permute.xlu0 5
      %1845 = vperm.xlu0 %1844, %v1760
      %v1846 = vpop.permute.xlu0 %1845
      %1847 = vset.pattern.permute.xlu0 5
      %1848 = vperm.xlu0 %1847, %v1761
      %v1849 = vpop.permute.xlu0 %1848
      %1850 = vset.pattern.permute.xlu0 5
      %1851 = vperm.xlu0 %1850, %v1762
      %v1852 = vpop.permute.xlu0 %1851
      %1853 = vset.pattern.permute.xlu0 5
      %1854 = vperm.xlu0 %1853, %v1763
      %v1855 = vpop.permute.xlu0 %1854
      %1856 = vset.pattern.permute.xlu0 5
      %1857 = vperm.xlu0 %1856, %v1764
      %v1858 = vpop.permute.xlu0 %1857
      %1859 = vset.pattern.permute.xlu0 5
      %1860 = vperm.xlu0 %1859, %v1765
      %v1861 = vpop.permute.xlu0 %1860
      %vm1862 = vcmp.eq.s32.totalorder %v180, %v1768
      %vm1863 = vcmp.eq.s32.totalorder %v180, %v1771
      %vm1864 = vcmp.eq.s32.totalorder %v180, %v1774
      %vm1865 = vcmp.eq.s32.totalorder %v180, %v1777
      %vm1866 = vcmp.eq.s32.totalorder %v180, %v1780
      %vm1867 = vcmp.eq.s32.totalorder %v180, %v1783
      %vm1868 = vcmp.eq.s32.totalorder %v180, %v1786
      %vm1869 = vcmp.eq.s32.totalorder %v180, %v1789
      %vm1870 = vcmp.eq.s32.totalorder %v180, %v1792
      %vm1871 = vcmp.eq.s32.totalorder %v180, %v1795
      %vm1872 = vcmp.eq.s32.totalorder %v180, %v1798
      %vm1873 = vcmp.eq.s32.totalorder %v180, %v1801
      %vm1874 = vcmp.eq.s32.totalorder %v180, %v1804
      %vm1875 = vcmp.eq.s32.totalorder %v180, %v1807
      %vm1876 = vcmp.eq.s32.totalorder %v180, %v1810
      %vm1877 = vcmp.eq.s32.totalorder %v180, %v1813
      %vm1878 = vcmp.eq.s32.totalorder %v180, %v1816
      %vm1879 = vcmp.eq.s32.totalorder %v180, %v1819
      %vm1880 = vcmp.eq.s32.totalorder %v180, %v1822
      %vm1881 = vcmp.eq.s32.totalorder %v180, %v1825
      %vm1882 = vcmp.eq.s32.totalorder %v180, %v1828
      %vm1883 = vcmp.eq.s32.totalorder %v180, %v1831
      %vm1884 = vcmp.eq.s32.totalorder %v180, %v1834
      %vm1885 = vcmp.eq.s32.totalorder %v180, %v1837
      %vm1886 = vcmp.eq.s32.totalorder %v180, %v1840
      %vm1887 = vcmp.eq.s32.totalorder %v180, %v1843
      %vm1888 = vcmp.eq.s32.totalorder %v180, %v1846
      %vm1889 = vcmp.eq.s32.totalorder %v180, %v1849
      %vm1890 = vcmp.eq.s32.totalorder %v180, %v1852
      %vm1891 = vcmp.eq.s32.totalorder %v180, %v1855
      %vm1892 = vcmp.eq.s32.totalorder %v180, %v1858
      %vm1893 = vcmp.eq.s32.totalorder %v180, %v1861
      %v1894 = vsel %vm1862, 1, 0
      %v1895 = vsel %vm1863, 1, 0
      %v1896 = vsel %vm1864, 1, 0
      %v1897 = vsel %vm1865, 1, 0
      %v1898 = vsel %vm1866, 1, 0
      %v1899 = vsel %vm1867, 1, 0
      %v1900 = vsel %vm1868, 1, 0
      %v1901 = vsel %vm1869, 1, 0
      %v1902 = vsel %vm1870, 1, 0
      %v1903 = vsel %vm1871, 1, 0
      %v1904 = vsel %vm1872, 1, 0
      %v1905 = vsel %vm1873, 1, 0
      %v1906 = vsel %vm1874, 1, 0
      %v1907 = vsel %vm1875, 1, 0
      %v1908 = vsel %vm1876, 1, 0
      %v1909 = vsel %vm1877, 1, 0
      %v1910 = vsel %vm1878, 1, 0
      %v1911 = vsel %vm1879, 1, 0
      %v1912 = vsel %vm1880, 1, 0
      %v1913 = vsel %vm1881, 1, 0
      %v1914 = vsel %vm1882, 1, 0
      %v1915 = vsel %vm1883, 1, 0
      %v1916 = vsel %vm1884, 1, 0
      %v1917 = vsel %vm1885, 1, 0
      %v1918 = vsel %vm1886, 1, 0
      %v1919 = vsel %vm1887, 1, 0
      %v1920 = vsel %vm1888, 1, 0
      %v1921 = vsel %vm1889, 1, 0
      %v1922 = vsel %vm1890, 1, 0
      %v1923 = vsel %vm1891, 1, 0
      %v1924 = vsel %vm1892, 1, 0
      %v1925 = vsel %vm1893, 1, 0
      %v1926 = vadd.s32 %v1702, %v1894
      %v1927 = vadd.s32 %v1703, %v1895
      %v1928 = vadd.s32 %v1704, %v1896
      %v1929 = vadd.s32 %v1705, %v1897
      %v1930 = vadd.s32 %v1706, %v1898
      %v1931 = vadd.s32 %v1707, %v1899
      %v1932 = vadd.s32 %v1708, %v1900
      %v1933 = vadd.s32 %v1709, %v1901
      %v1934 = vadd.s32 %v1710, %v1902
      %v1935 = vadd.s32 %v1711, %v1903
      %v1936 = vadd.s32 %v1712, %v1904
      %v1937 = vadd.s32 %v1713, %v1905
      %v1938 = vadd.s32 %v1714, %v1906
      %v1939 = vadd.s32 %v1715, %v1907
      %v1940 = vadd.s32 %v1716, %v1908
      %v1941 = vadd.s32 %v1717, %v1909
      %v1942 = vadd.s32 %v1718, %v1910
      %v1943 = vadd.s32 %v1719, %v1911
      %v1944 = vadd.s32 %v1720, %v1912
      %v1945 = vadd.s32 %v1721, %v1913
      %v1946 = vadd.s32 %v1722, %v1914
      %v1947 = vadd.s32 %v1723, %v1915
      %v1948 = vadd.s32 %v1724, %v1916
      %v1949 = vadd.s32 %v1725, %v1917
      %v1950 = vadd.s32 %v1726, %v1918
      %v1951 = vadd.s32 %v1727, %v1919
      %v1952 = vadd.s32 %v1728, %v1920
      %v1953 = vadd.s32 %v1729, %v1921
      %v1954 = vadd.s32 %v1730, %v1922
      %v1955 = vadd.s32 %v1731, %v1923
      %v1956 = vadd.s32 %v1732, %v1924
      %v1957 = vadd.s32 %v1733, %v1925
      %v1958 = vadd.s32 %v147, 36
      %v1959 = vadd.s32 %v148, 36
      %v1960 = vadd.s32 %v149, 36
      %v1961 = vadd.s32 %v150, 36
      %v1962 = vadd.s32 %v151, 36
      %v1963 = vadd.s32 %v152, 36
      %v1964 = vadd.s32 %v153, 36
      %v1965 = vadd.s32 %v154, 36
      %v1966 = vadd.s32 %v155, 36
      %v1967 = vadd.s32 %v156, 36
      %v1968 = vadd.s32 %v157, 36
      %v1969 = vadd.s32 %v158, 36
      %v1970 = vadd.s32 %v159, 36
      %v1971 = vadd.s32 %v160, 36
      %v1972 = vadd.s32 %v161, 36
      %v1973 = vadd.s32 %v162, 36
      %v1974 = vadd.s32 %v163, 36
      %v1975 = vadd.s32 %v164, 36
      %v1976 = vadd.s32 %v165, 36
      %v1977 = vadd.s32 %v166, 36
      %v1978 = vadd.s32 %v167, 36
      %v1979 = vadd.s32 %v168, 36
      %v1980 = vadd.s32 %v169, 36
      %v1981 = vadd.s32 %v170, 36
      %v1982 = vadd.s32 %v171, 36
      %v1983 = vadd.s32 %v172, 36
      %v1984 = vadd.s32 %v173, 36
      %v1985 = vadd.s32 %v174, 36
      %v1986 = vadd.s32 %v175, 36
      %v1987 = vadd.s32 %v176, 36
      %v1988 = vadd.s32 %v177, 36
      %v1989 = vadd.s32 %v178, 36
      %1990 = vset.pattern.permute.xlu0 6
      %1991 = vperm.xlu0 %1990, %v1958
      %v1992 = vpop.permute.xlu0 %1991
      %1993 = vset.pattern.permute.xlu0 6
      %1994 = vperm.xlu0 %1993, %v1959
      %v1995 = vpop.permute.xlu0 %1994
      %1996 = vset.pattern.permute.xlu0 6
      %1997 = vperm.xlu0 %1996, %v1960
      %v1998 = vpop.permute.xlu0 %1997
      %1999 = vset.pattern.permute.xlu0 6
      %2000 = vperm.xlu0 %1999, %v1961
      %v2001 = vpop.permute.xlu0 %2000
      %2002 = vset.pattern.permute.xlu0 6
      %2003 = vperm.xlu0 %2002, %v1962
      %v2004 = vpop.permute.xlu0 %2003
      %2005 = vset.pattern.permute.xlu0 6
      %2006 = vperm.xlu0 %2005, %v1963
      %v2007 = vpop.permute.xlu0 %2006
      %2008 = vset.pattern.permute.xlu0 6
      %2009 = vperm.xlu0 %2008, %v1964
      %v2010 = vpop.permute.xlu0 %2009
      %2011 = vset.pattern.permute.xlu0 6
      %2012 = vperm.xlu0 %2011, %v1965
      %v2013 = vpop.permute.xlu0 %2012
      %2014 = vset.pattern.permute.xlu0 6
      %2015 = vperm.xlu0 %2014, %v1966
      %v2016 = vpop.permute.xlu0 %2015
      %2017 = vset.pattern.permute.xlu0 6
      %2018 = vperm.xlu0 %2017, %v1967
      %v2019 = vpop.permute.xlu0 %2018
      %2020 = vset.pattern.permute.xlu0 6
      %2021 = vperm.xlu0 %2020, %v1968
      %v2022 = vpop.permute.xlu0 %2021
      %2023 = vset.pattern.permute.xlu0 6
      %2024 = vperm.xlu0 %2023, %v1969
      %v2025 = vpop.permute.xlu0 %2024
      %2026 = vset.pattern.permute.xlu0 6
      %2027 = vperm.xlu0 %2026, %v1970
      %v2028 = vpop.permute.xlu0 %2027
      %2029 = vset.pattern.permute.xlu0 6
      %2030 = vperm.xlu0 %2029, %v1971
      %v2031 = vpop.permute.xlu0 %2030
      %2032 = vset.pattern.permute.xlu0 6
      %2033 = vperm.xlu0 %2032, %v1972
      %v2034 = vpop.permute.xlu0 %2033
      %2035 = vset.pattern.permute.xlu0 6
      %2036 = vperm.xlu0 %2035, %v1973
      %v2037 = vpop.permute.xlu0 %2036
      %2038 = vset.pattern.permute.xlu0 6
      %2039 = vperm.xlu0 %2038, %v1974
      %v2040 = vpop.permute.xlu0 %2039
      %2041 = vset.pattern.permute.xlu0 6
      %2042 = vperm.xlu0 %2041, %v1975
      %v2043 = vpop.permute.xlu0 %2042
      %2044 = vset.pattern.permute.xlu0 6
      %2045 = vperm.xlu0 %2044, %v1976
      %v2046 = vpop.permute.xlu0 %2045
      %2047 = vset.pattern.permute.xlu0 6
      %2048 = vperm.xlu0 %2047, %v1977
      %v2049 = vpop.permute.xlu0 %2048
      %2050 = vset.pattern.permute.xlu0 6
      %2051 = vperm.xlu0 %2050, %v1978
      %v2052 = vpop.permute.xlu0 %2051
      %2053 = vset.pattern.permute.xlu0 6
      %2054 = vperm.xlu0 %2053, %v1979
      %v2055 = vpop.permute.xlu0 %2054
      %2056 = vset.pattern.permute.xlu0 6
      %2057 = vperm.xlu0 %2056, %v1980
      %v2058 = vpop.permute.xlu0 %2057
      %2059 = vset.pattern.permute.xlu0 6
      %2060 = vperm.xlu0 %2059, %v1981
      %v2061 = vpop.permute.xlu0 %2060
      %2062 = vset.pattern.permute.xlu0 6
      %2063 = vperm.xlu0 %2062, %v1982
      %v2064 = vpop.permute.xlu0 %2063
      %2065 = vset.pattern.permute.xlu0 6
      %2066 = vperm.xlu0 %2065, %v1983
      %v2067 = vpop.permute.xlu0 %2066
      %2068 = vset.pattern.permute.xlu0 6
      %2069 = vperm.xlu0 %2068, %v1984
      %v2070 = vpop.permute.xlu0 %2069
      %2071 = vset.pattern.permute.xlu0 6
      %2072 = vperm.xlu0 %2071, %v1985
      %v2073 = vpop.permute.xlu0 %2072
      %2074 = vset.pattern.permute.xlu0 6
      %2075 = vperm.xlu0 %2074, %v1986
      %v2076 = vpop.permute.xlu0 %2075
      %2077 = vset.pattern.permute.xlu0 6
      %2078 = vperm.xlu0 %2077, %v1987
      %v2079 = vpop.permute.xlu0 %2078
      %2080 = vset.pattern.permute.xlu0 6
      %2081 = vperm.xlu0 %2080, %v1988
      %v2082 = vpop.permute.xlu0 %2081
      %2083 = vset.pattern.permute.xlu0 6
      %2084 = vperm.xlu0 %2083, %v1989
      %v2085 = vpop.permute.xlu0 %2084
      %vm2086 = vcmp.eq.s32.totalorder %v180, %v1992
      %vm2087 = vcmp.eq.s32.totalorder %v180, %v1995
      %vm2088 = vcmp.eq.s32.totalorder %v180, %v1998
      %vm2089 = vcmp.eq.s32.totalorder %v180, %v2001
      %vm2090 = vcmp.eq.s32.totalorder %v180, %v2004
      %vm2091 = vcmp.eq.s32.totalorder %v180, %v2007
      %vm2092 = vcmp.eq.s32.totalorder %v180, %v2010
      %vm2093 = vcmp.eq.s32.totalorder %v180, %v2013
      %vm2094 = vcmp.eq.s32.totalorder %v180, %v2016
      %vm2095 = vcmp.eq.s32.totalorder %v180, %v2019
      %vm2096 = vcmp.eq.s32.totalorder %v180, %v2022
      %vm2097 = vcmp.eq.s32.totalorder %v180, %v2025
      %vm2098 = vcmp.eq.s32.totalorder %v180, %v2028
      %vm2099 = vcmp.eq.s32.totalorder %v180, %v2031
      %vm2100 = vcmp.eq.s32.totalorder %v180, %v2034
      %vm2101 = vcmp.eq.s32.totalorder %v180, %v2037
      %vm2102 = vcmp.eq.s32.totalorder %v180, %v2040
      %vm2103 = vcmp.eq.s32.totalorder %v180, %v2043
      %vm2104 = vcmp.eq.s32.totalorder %v180, %v2046
      %vm2105 = vcmp.eq.s32.totalorder %v180, %v2049
      %vm2106 = vcmp.eq.s32.totalorder %v180, %v2052
      %vm2107 = vcmp.eq.s32.totalorder %v180, %v2055
      %vm2108 = vcmp.eq.s32.totalorder %v180, %v2058
      %vm2109 = vcmp.eq.s32.totalorder %v180, %v2061
      %vm2110 = vcmp.eq.s32.totalorder %v180, %v2064
      %vm2111 = vcmp.eq.s32.totalorder %v180, %v2067
      %vm2112 = vcmp.eq.s32.totalorder %v180, %v2070
      %vm2113 = vcmp.eq.s32.totalorder %v180, %v2073
      %vm2114 = vcmp.eq.s32.totalorder %v180, %v2076
      %vm2115 = vcmp.eq.s32.totalorder %v180, %v2079
      %vm2116 = vcmp.eq.s32.totalorder %v180, %v2082
      %vm2117 = vcmp.eq.s32.totalorder %v180, %v2085
      %v2118 = vsel %vm2086, 1, 0
      %v2119 = vsel %vm2087, 1, 0
      %v2120 = vsel %vm2088, 1, 0
      %v2121 = vsel %vm2089, 1, 0
      %v2122 = vsel %vm2090, 1, 0
      %v2123 = vsel %vm2091, 1, 0
      %v2124 = vsel %vm2092, 1, 0
      %v2125 = vsel %vm2093, 1, 0
      %v2126 = vsel %vm2094, 1, 0
      %v2127 = vsel %vm2095, 1, 0
      %v2128 = vsel %vm2096, 1, 0
      %v2129 = vsel %vm2097, 1, 0
      %v2130 = vsel %vm2098, 1, 0
      %v2131 = vsel %vm2099, 1, 0
      %v2132 = vsel %vm2100, 1, 0
      %v2133 = vsel %vm2101, 1, 0
      %v2134 = vsel %vm2102, 1, 0
      %v2135 = vsel %vm2103, 1, 0
      %v2136 = vsel %vm2104, 1, 0
      %v2137 = vsel %vm2105, 1, 0
      %v2138 = vsel %vm2106, 1, 0
      %v2139 = vsel %vm2107, 1, 0
      %v2140 = vsel %vm2108, 1, 0
      %v2141 = vsel %vm2109, 1, 0
      %v2142 = vsel %vm2110, 1, 0
      %v2143 = vsel %vm2111, 1, 0
      %v2144 = vsel %vm2112, 1, 0
      %v2145 = vsel %vm2113, 1, 0
      %v2146 = vsel %vm2114, 1, 0
      %v2147 = vsel %vm2115, 1, 0
      %v2148 = vsel %vm2116, 1, 0
      %v2149 = vsel %vm2117, 1, 0
      %v2150 = vadd.s32 %v1926, %v2118
      %v2151 = vadd.s32 %v1927, %v2119
      %v2152 = vadd.s32 %v1928, %v2120
      %v2153 = vadd.s32 %v1929, %v2121
      %v2154 = vadd.s32 %v1930, %v2122
      %v2155 = vadd.s32 %v1931, %v2123
      %v2156 = vadd.s32 %v1932, %v2124
      %v2157 = vadd.s32 %v1933, %v2125
      %v2158 = vadd.s32 %v1934, %v2126
      %v2159 = vadd.s32 %v1935, %v2127
      %v2160 = vadd.s32 %v1936, %v2128
      %v2161 = vadd.s32 %v1937, %v2129
      %v2162 = vadd.s32 %v1938, %v2130
      %v2163 = vadd.s32 %v1939, %v2131
      %v2164 = vadd.s32 %v1940, %v2132
      %v2165 = vadd.s32 %v1941, %v2133
      %v2166 = vadd.s32 %v1942, %v2134
      %v2167 = vadd.s32 %v1943, %v2135
      %v2168 = vadd.s32 %v1944, %v2136
      %v2169 = vadd.s32 %v1945, %v2137
      %v2170 = vadd.s32 %v1946, %v2138
      %v2171 = vadd.s32 %v1947, %v2139
      %v2172 = vadd.s32 %v1948, %v2140
      %v2173 = vadd.s32 %v1949, %v2141
      %v2174 = vadd.s32 %v1950, %v2142
      %v2175 = vadd.s32 %v1951, %v2143
      %v2176 = vadd.s32 %v1952, %v2144
      %v2177 = vadd.s32 %v1953, %v2145
      %v2178 = vadd.s32 %v1954, %v2146
      %v2179 = vadd.s32 %v1955, %v2147
      %v2180 = vadd.s32 %v1956, %v2148
      %v2181 = vadd.s32 %v1957, %v2149
      %v2182 = vadd.s32 %v147, 42
      %v2183 = vadd.s32 %v148, 42
      %v2184 = vadd.s32 %v149, 42
      %v2185 = vadd.s32 %v150, 42
      %v2186 = vadd.s32 %v151, 42
      %v2187 = vadd.s32 %v152, 42
      %v2188 = vadd.s32 %v153, 42
      %v2189 = vadd.s32 %v154, 42
      %v2190 = vadd.s32 %v155, 42
      %v2191 = vadd.s32 %v156, 42
      %v2192 = vadd.s32 %v157, 42
      %v2193 = vadd.s32 %v158, 42
      %v2194 = vadd.s32 %v159, 42
      %v2195 = vadd.s32 %v160, 42
      %v2196 = vadd.s32 %v161, 42
      %v2197 = vadd.s32 %v162, 42
      %v2198 = vadd.s32 %v163, 42
      %v2199 = vadd.s32 %v164, 42
      %v2200 = vadd.s32 %v165, 42
      %v2201 = vadd.s32 %v166, 42
      %v2202 = vadd.s32 %v167, 42
      %v2203 = vadd.s32 %v168, 42
      %v2204 = vadd.s32 %v169, 42
      %v2205 = vadd.s32 %v170, 42
      %v2206 = vadd.s32 %v171, 42
      %v2207 = vadd.s32 %v172, 42
      %v2208 = vadd.s32 %v173, 42
      %v2209 = vadd.s32 %v174, 42
      %v2210 = vadd.s32 %v175, 42
      %v2211 = vadd.s32 %v176, 42
      %v2212 = vadd.s32 %v177, 42
      %v2213 = vadd.s32 %v178, 42
      %2214 = vset.pattern.permute.xlu0 7
      %2215 = vperm.xlu0 %2214, %v2182
      %v2216 = vpop.permute.xlu0 %2215
      %2217 = vset.pattern.permute.xlu0 7
      %2218 = vperm.xlu0 %2217, %v2183
      %v2219 = vpop.permute.xlu0 %2218
      %2220 = vset.pattern.permute.xlu0 7
      %2221 = vperm.xlu0 %2220, %v2184
      %v2222 = vpop.permute.xlu0 %2221
      %2223 = vset.pattern.permute.xlu0 7
      %2224 = vperm.xlu0 %2223, %v2185
      %v2225 = vpop.permute.xlu0 %2224
      %2226 = vset.pattern.permute.xlu0 7
      %2227 = vperm.xlu0 %2226, %v2186
      %v2228 = vpop.permute.xlu0 %2227
      %2229 = vset.pattern.permute.xlu0 7
      %2230 = vperm.xlu0 %2229, %v2187
      %v2231 = vpop.permute.xlu0 %2230
      %2232 = vset.pattern.permute.xlu0 7
      %2233 = vperm.xlu0 %2232, %v2188
      %v2234 = vpop.permute.xlu0 %2233
      %2235 = vset.pattern.permute.xlu0 7
      %2236 = vperm.xlu0 %2235, %v2189
      %v2237 = vpop.permute.xlu0 %2236
      %2238 = vset.pattern.permute.xlu0 7
      %2239 = vperm.xlu0 %2238, %v2190
      %v2240 = vpop.permute.xlu0 %2239
      %2241 = vset.pattern.permute.xlu0 7
      %2242 = vperm.xlu0 %2241, %v2191
      %v2243 = vpop.permute.xlu0 %2242
      %2244 = vset.pattern.permute.xlu0 7
      %2245 = vperm.xlu0 %2244, %v2192
      %v2246 = vpop.permute.xlu0 %2245
      %2247 = vset.pattern.permute.xlu0 7
      %2248 = vperm.xlu0 %2247, %v2193
      %v2249 = vpop.permute.xlu0 %2248
      %2250 = vset.pattern.permute.xlu0 7
      %2251 = vperm.xlu0 %2250, %v2194
      %v2252 = vpop.permute.xlu0 %2251
      %2253 = vset.pattern.permute.xlu0 7
      %2254 = vperm.xlu0 %2253, %v2195
      %v2255 = vpop.permute.xlu0 %2254
      %2256 = vset.pattern.permute.xlu0 7
      %2257 = vperm.xlu0 %2256, %v2196
      %v2258 = vpop.permute.xlu0 %2257
      %2259 = vset.pattern.permute.xlu0 7
      %2260 = vperm.xlu0 %2259, %v2197
      %v2261 = vpop.permute.xlu0 %2260
      %2262 = vset.pattern.permute.xlu0 7
      %2263 = vperm.xlu0 %2262, %v2198
      %v2264 = vpop.permute.xlu0 %2263
      %2265 = vset.pattern.permute.xlu0 7
      %2266 = vperm.xlu0 %2265, %v2199
      %v2267 = vpop.permute.xlu0 %2266
      %2268 = vset.pattern.permute.xlu0 7
      %2269 = vperm.xlu0 %2268, %v2200
      %v2270 = vpop.permute.xlu0 %2269
      %2271 = vset.pattern.permute.xlu0 7
      %2272 = vperm.xlu0 %2271, %v2201
      %v2273 = vpop.permute.xlu0 %2272
      %2274 = vset.pattern.permute.xlu0 7
      %2275 = vperm.xlu0 %2274, %v2202
      %v2276 = vpop.permute.xlu0 %2275
      %2277 = vset.pattern.permute.xlu0 7
      %2278 = vperm.xlu0 %2277, %v2203
      %v2279 = vpop.permute.xlu0 %2278
      %2280 = vset.pattern.permute.xlu0 7
      %2281 = vperm.xlu0 %2280, %v2204
      %v2282 = vpop.permute.xlu0 %2281
      %2283 = vset.pattern.permute.xlu0 7
      %2284 = vperm.xlu0 %2283, %v2205
      %v2285 = vpop.permute.xlu0 %2284
      %2286 = vset.pattern.permute.xlu0 7
      %2287 = vperm.xlu0 %2286, %v2206
      %v2288 = vpop.permute.xlu0 %2287
      %2289 = vset.pattern.permute.xlu0 7
      %2290 = vperm.xlu0 %2289, %v2207
      %v2291 = vpop.permute.xlu0 %2290
      %2292 = vset.pattern.permute.xlu0 7
      %2293 = vperm.xlu0 %2292, %v2208
      %v2294 = vpop.permute.xlu0 %2293
      %2295 = vset.pattern.permute.xlu0 7
      %2296 = vperm.xlu0 %2295, %v2209
      %v2297 = vpop.permute.xlu0 %2296
      %2298 = vset.pattern.permute.xlu0 7
      %2299 = vperm.xlu0 %2298, %v2210
      %v2300 = vpop.permute.xlu0 %2299
      %2301 = vset.pattern.permute.xlu0 7
      %2302 = vperm.xlu0 %2301, %v2211
      %v2303 = vpop.permute.xlu0 %2302
      %2304 = vset.pattern.permute.xlu0 7
      %2305 = vperm.xlu0 %2304, %v2212
      %v2306 = vpop.permute.xlu0 %2305
      %2307 = vset.pattern.permute.xlu0 7
      %2308 = vperm.xlu0 %2307, %v2213
      %v2309 = vpop.permute.xlu0 %2308
      %vm2310 = vcmp.eq.s32.totalorder %v180, %v2216
      %vm2311 = vcmp.eq.s32.totalorder %v180, %v2219
      %vm2312 = vcmp.eq.s32.totalorder %v180, %v2222
      %vm2313 = vcmp.eq.s32.totalorder %v180, %v2225
      %vm2314 = vcmp.eq.s32.totalorder %v180, %v2228
      %vm2315 = vcmp.eq.s32.totalorder %v180, %v2231
      %vm2316 = vcmp.eq.s32.totalorder %v180, %v2234
      %vm2317 = vcmp.eq.s32.totalorder %v180, %v2237
      %vm2318 = vcmp.eq.s32.totalorder %v180, %v2240
      %vm2319 = vcmp.eq.s32.totalorder %v180, %v2243
      %vm2320 = vcmp.eq.s32.totalorder %v180, %v2246
      %vm2321 = vcmp.eq.s32.totalorder %v180, %v2249
      %vm2322 = vcmp.eq.s32.totalorder %v180, %v2252
      %vm2323 = vcmp.eq.s32.totalorder %v180, %v2255
      %vm2324 = vcmp.eq.s32.totalorder %v180, %v2258
      %vm2325 = vcmp.eq.s32.totalorder %v180, %v2261
      %vm2326 = vcmp.eq.s32.totalorder %v180, %v2264
      %vm2327 = vcmp.eq.s32.totalorder %v180, %v2267
      %vm2328 = vcmp.eq.s32.totalorder %v180, %v2270
      %vm2329 = vcmp.eq.s32.totalorder %v180, %v2273
      %vm2330 = vcmp.eq.s32.totalorder %v180, %v2276
      %vm2331 = vcmp.eq.s32.totalorder %v180, %v2279
      %vm2332 = vcmp.eq.s32.totalorder %v180, %v2282
      %vm2333 = vcmp.eq.s32.totalorder %v180, %v2285
      %vm2334 = vcmp.eq.s32.totalorder %v180, %v2288
      %vm2335 = vcmp.eq.s32.totalorder %v180, %v2291
      %vm2336 = vcmp.eq.s32.totalorder %v180, %v2294
      %vm2337 = vcmp.eq.s32.totalorder %v180, %v2297
      %vm2338 = vcmp.eq.s32.totalorder %v180, %v2300
      %vm2339 = vcmp.eq.s32.totalorder %v180, %v2303
      %vm2340 = vcmp.eq.s32.totalorder %v180, %v2306
      %vm2341 = vcmp.eq.s32.totalorder %v180, %v2309
      %v2342 = vsel %vm2310, 1, 0
      %v2343 = vsel %vm2311, 1, 0
      %v2344 = vsel %vm2312, 1, 0
      %v2345 = vsel %vm2313, 1, 0
      %v2346 = vsel %vm2314, 1, 0
      %v2347 = vsel %vm2315, 1, 0
      %v2348 = vsel %vm2316, 1, 0
      %v2349 = vsel %vm2317, 1, 0
      %v2350 = vsel %vm2318, 1, 0
      %v2351 = vsel %vm2319, 1, 0
      %v2352 = vsel %vm2320, 1, 0
      %v2353 = vsel %vm2321, 1, 0
      %v2354 = vsel %vm2322, 1, 0
      %v2355 = vsel %vm2323, 1, 0
      %v2356 = vsel %vm2324, 1, 0
      %v2357 = vsel %vm2325, 1, 0
      %v2358 = vsel %vm2326, 1, 0
      %v2359 = vsel %vm2327, 1, 0
      %v2360 = vsel %vm2328, 1, 0
      %v2361 = vsel %vm2329, 1, 0
      %v2362 = vsel %vm2330, 1, 0
      %v2363 = vsel %vm2331, 1, 0
      %v2364 = vsel %vm2332, 1, 0
      %v2365 = vsel %vm2333, 1, 0
      %v2366 = vsel %vm2334, 1, 0
      %v2367 = vsel %vm2335, 1, 0
      %v2368 = vsel %vm2336, 1, 0
      %v2369 = vsel %vm2337, 1, 0
      %v2370 = vsel %vm2338, 1, 0
      %v2371 = vsel %vm2339, 1, 0
      %v2372 = vsel %vm2340, 1, 0
      %v2373 = vsel %vm2341, 1, 0
      %v2374 = vadd.s32 %v2150, %v2342
      %v2375 = vadd.s32 %v2151, %v2343
      %v2376 = vadd.s32 %v2152, %v2344
      %v2377 = vadd.s32 %v2153, %v2345
      %v2378 = vadd.s32 %v2154, %v2346
      %v2379 = vadd.s32 %v2155, %v2347
      %v2380 = vadd.s32 %v2156, %v2348
      %v2381 = vadd.s32 %v2157, %v2349
      %v2382 = vadd.s32 %v2158, %v2350
      %v2383 = vadd.s32 %v2159, %v2351
      %v2384 = vadd.s32 %v2160, %v2352
      %v2385 = vadd.s32 %v2161, %v2353
      %v2386 = vadd.s32 %v2162, %v2354
      %v2387 = vadd.s32 %v2163, %v2355
      %v2388 = vadd.s32 %v2164, %v2356
      %v2389 = vadd.s32 %v2165, %v2357
      %v2390 = vadd.s32 %v2166, %v2358
      %v2391 = vadd.s32 %v2167, %v2359
      %v2392 = vadd.s32 %v2168, %v2360
      %v2393 = vadd.s32 %v2169, %v2361
      %v2394 = vadd.s32 %v2170, %v2362
      %v2395 = vadd.s32 %v2171, %v2363
      %v2396 = vadd.s32 %v2172, %v2364
      %v2397 = vadd.s32 %v2173, %v2365
      %v2398 = vadd.s32 %v2174, %v2366
      %v2399 = vadd.s32 %v2175, %v2367
      %v2400 = vadd.s32 %v2176, %v2368
      %v2401 = vadd.s32 %v2177, %v2369
      %v2402 = vadd.s32 %v2178, %v2370
      %v2403 = vadd.s32 %v2179, %v2371
      %v2404 = vadd.s32 %v2180, %v2372
      %v2405 = vadd.s32 %v2181, %v2373
      %v2406 = vadd.s32 %v147, 44
      %v2407 = vadd.s32 %v148, 44
      %v2408 = vadd.s32 %v149, 44
      %v2409 = vadd.s32 %v150, 44
      %v2410 = vadd.s32 %v151, 44
      %v2411 = vadd.s32 %v152, 44
      %v2412 = vadd.s32 %v153, 44
      %v2413 = vadd.s32 %v154, 44
      %v2414 = vadd.s32 %v155, 44
      %v2415 = vadd.s32 %v156, 44
      %v2416 = vadd.s32 %v157, 44
      %v2417 = vadd.s32 %v158, 44
      %v2418 = vadd.s32 %v159, 44
      %v2419 = vadd.s32 %v160, 44
      %v2420 = vadd.s32 %v161, 44
      %v2421 = vadd.s32 %v162, 44
      %v2422 = vadd.s32 %v163, 44
      %v2423 = vadd.s32 %v164, 44
      %v2424 = vadd.s32 %v165, 44
      %v2425 = vadd.s32 %v166, 44
      %v2426 = vadd.s32 %v167, 44
      %v2427 = vadd.s32 %v168, 44
      %v2428 = vadd.s32 %v169, 44
      %v2429 = vadd.s32 %v170, 44
      %v2430 = vadd.s32 %v171, 44
      %v2431 = vadd.s32 %v172, 44
      %v2432 = vadd.s32 %v173, 44
      %v2433 = vadd.s32 %v174, 44
      %v2434 = vadd.s32 %v175, 44
      %v2435 = vadd.s32 %v176, 44
      %v2436 = vadd.s32 %v177, 44
      %v2437 = vadd.s32 %v178, 44
      %2438 = vset.pattern.permute.xlu0 8
      %2439 = vperm.xlu0 %2438, %v2406
      %v2440 = vpop.permute.xlu0 %2439
      %2441 = vset.pattern.permute.xlu0 8
      %2442 = vperm.xlu0 %2441, %v2407
      %v2443 = vpop.permute.xlu0 %2442
      %2444 = vset.pattern.permute.xlu0 8
      %2445 = vperm.xlu0 %2444, %v2408
      %v2446 = vpop.permute.xlu0 %2445
      %2447 = vset.pattern.permute.xlu0 8
      %2448 = vperm.xlu0 %2447, %v2409
      %v2449 = vpop.permute.xlu0 %2448
      %2450 = vset.pattern.permute.xlu0 8
      %2451 = vperm.xlu0 %2450, %v2410
      %v2452 = vpop.permute.xlu0 %2451
      %2453 = vset.pattern.permute.xlu0 8
      %2454 = vperm.xlu0 %2453, %v2411
      %v2455 = vpop.permute.xlu0 %2454
      %2456 = vset.pattern.permute.xlu0 8
      %2457 = vperm.xlu0 %2456, %v2412
      %v2458 = vpop.permute.xlu0 %2457
      %2459 = vset.pattern.permute.xlu0 8
      %2460 = vperm.xlu0 %2459, %v2413
      %v2461 = vpop.permute.xlu0 %2460
      %2462 = vset.pattern.permute.xlu0 8
      %2463 = vperm.xlu0 %2462, %v2414
      %v2464 = vpop.permute.xlu0 %2463
      %2465 = vset.pattern.permute.xlu0 8
      %2466 = vperm.xlu0 %2465, %v2415
      %v2467 = vpop.permute.xlu0 %2466
      %2468 = vset.pattern.permute.xlu0 8
      %2469 = vperm.xlu0 %2468, %v2416
      %v2470 = vpop.permute.xlu0 %2469
      %2471 = vset.pattern.permute.xlu0 8
      %2472 = vperm.xlu0 %2471, %v2417
      %v2473 = vpop.permute.xlu0 %2472
      %2474 = vset.pattern.permute.xlu0 8
      %2475 = vperm.xlu0 %2474, %v2418
      %v2476 = vpop.permute.xlu0 %2475
      %2477 = vset.pattern.permute.xlu0 8
      %2478 = vperm.xlu0 %2477, %v2419
      %v2479 = vpop.permute.xlu0 %2478
      %2480 = vset.pattern.permute.xlu0 8
      %2481 = vperm.xlu0 %2480, %v2420
      %v2482 = vpop.permute.xlu0 %2481
      %2483 = vset.pattern.permute.xlu0 8
      %2484 = vperm.xlu0 %2483, %v2421
      %v2485 = vpop.permute.xlu0 %2484
      %2486 = vset.pattern.permute.xlu0 8
      %2487 = vperm.xlu0 %2486, %v2422
      %v2488 = vpop.permute.xlu0 %2487
      %2489 = vset.pattern.permute.xlu0 8
      %2490 = vperm.xlu0 %2489, %v2423
      %v2491 = vpop.permute.xlu0 %2490
      %2492 = vset.pattern.permute.xlu0 8
      %2493 = vperm.xlu0 %2492, %v2424
      %v2494 = vpop.permute.xlu0 %2493
      %2495 = vset.pattern.permute.xlu0 8
      %2496 = vperm.xlu0 %2495, %v2425
      %v2497 = vpop.permute.xlu0 %2496
      %2498 = vset.pattern.permute.xlu0 8
      %2499 = vperm.xlu0 %2498, %v2426
      %v2500 = vpop.permute.xlu0 %2499
      %2501 = vset.pattern.permute.xlu0 8
      %2502 = vperm.xlu0 %2501, %v2427
      %v2503 = vpop.permute.xlu0 %2502
      %2504 = vset.pattern.permute.xlu0 8
      %2505 = vperm.xlu0 %2504, %v2428
      %v2506 = vpop.permute.xlu0 %2505
      %2507 = vset.pattern.permute.xlu0 8
      %2508 = vperm.xlu0 %2507, %v2429
      %v2509 = vpop.permute.xlu0 %2508
      %2510 = vset.pattern.permute.xlu0 8
      %2511 = vperm.xlu0 %2510, %v2430
      %v2512 = vpop.permute.xlu0 %2511
      %2513 = vset.pattern.permute.xlu0 8
      %2514 = vperm.xlu0 %2513, %v2431
      %v2515 = vpop.permute.xlu0 %2514
      %2516 = vset.pattern.permute.xlu0 8
      %2517 = vperm.xlu0 %2516, %v2432
      %v2518 = vpop.permute.xlu0 %2517
      %2519 = vset.pattern.permute.xlu0 8
      %2520 = vperm.xlu0 %2519, %v2433
      %v2521 = vpop.permute.xlu0 %2520
      %2522 = vset.pattern.permute.xlu0 8
      %2523 = vperm.xlu0 %2522, %v2434
      %v2524 = vpop.permute.xlu0 %2523
      %2525 = vset.pattern.permute.xlu0 8
      %2526 = vperm.xlu0 %2525, %v2435
      %v2527 = vpop.permute.xlu0 %2526
      %2528 = vset.pattern.permute.xlu0 8
      %2529 = vperm.xlu0 %2528, %v2436
      %v2530 = vpop.permute.xlu0 %2529
      %2531 = vset.pattern.permute.xlu0 8
      %2532 = vperm.xlu0 %2531, %v2437
      %v2533 = vpop.permute.xlu0 %2532
      %vm2534 = vcmp.eq.s32.totalorder %v180, %v2440
      %vm2535 = vcmp.eq.s32.totalorder %v180, %v2443
      %vm2536 = vcmp.eq.s32.totalorder %v180, %v2446
      %vm2537 = vcmp.eq.s32.totalorder %v180, %v2449
      %vm2538 = vcmp.eq.s32.totalorder %v180, %v2452
      %vm2539 = vcmp.eq.s32.totalorder %v180, %v2455
      %vm2540 = vcmp.eq.s32.totalorder %v180, %v2458
      %vm2541 = vcmp.eq.s32.totalorder %v180, %v2461
      %vm2542 = vcmp.eq.s32.totalorder %v180, %v2464
      %vm2543 = vcmp.eq.s32.totalorder %v180, %v2467
      %vm2544 = vcmp.eq.s32.totalorder %v180, %v2470
      %vm2545 = vcmp.eq.s32.totalorder %v180, %v2473
      %vm2546 = vcmp.eq.s32.totalorder %v180, %v2476
      %vm2547 = vcmp.eq.s32.totalorder %v180, %v2479
      %vm2548 = vcmp.eq.s32.totalorder %v180, %v2482
      %vm2549 = vcmp.eq.s32.totalorder %v180, %v2485
      %vm2550 = vcmp.eq.s32.totalorder %v180, %v2488
      %vm2551 = vcmp.eq.s32.totalorder %v180, %v2491
      %vm2552 = vcmp.eq.s32.totalorder %v180, %v2494
      %vm2553 = vcmp.eq.s32.totalorder %v180, %v2497
      %vm2554 = vcmp.eq.s32.totalorder %v180, %v2500
      %vm2555 = vcmp.eq.s32.totalorder %v180, %v2503
      %vm2556 = vcmp.eq.s32.totalorder %v180, %v2506
      %vm2557 = vcmp.eq.s32.totalorder %v180, %v2509
      %vm2558 = vcmp.eq.s32.totalorder %v180, %v2512
      %vm2559 = vcmp.eq.s32.totalorder %v180, %v2515
      %vm2560 = vcmp.eq.s32.totalorder %v180, %v2518
      %vm2561 = vcmp.eq.s32.totalorder %v180, %v2521
      %vm2562 = vcmp.eq.s32.totalorder %v180, %v2524
      %vm2563 = vcmp.eq.s32.totalorder %v180, %v2527
      %vm2564 = vcmp.eq.s32.totalorder %v180, %v2530
      %vm2565 = vcmp.eq.s32.totalorder %v180, %v2533
      %v2566 = vsel %vm2534, 1, 0
      %v2567 = vsel %vm2535, 1, 0
      %v2568 = vsel %vm2536, 1, 0
      %v2569 = vsel %vm2537, 1, 0
      %v2570 = vsel %vm2538, 1, 0
      %v2571 = vsel %vm2539, 1, 0
      %v2572 = vsel %vm2540, 1, 0
      %v2573 = vsel %vm2541, 1, 0
      %v2574 = vsel %vm2542, 1, 0
      %v2575 = vsel %vm2543, 1, 0
      %v2576 = vsel %vm2544, 1, 0
      %v2577 = vsel %vm2545, 1, 0
      %v2578 = vsel %vm2546, 1, 0
      %v2579 = vsel %vm2547, 1, 0
      %v2580 = vsel %vm2548, 1, 0
      %v2581 = vsel %vm2549, 1, 0
      %v2582 = vsel %vm2550, 1, 0
      %v2583 = vsel %vm2551, 1, 0
      %v2584 = vsel %vm2552, 1, 0
      %v2585 = vsel %vm2553, 1, 0
      %v2586 = vsel %vm2554, 1, 0
      %v2587 = vsel %vm2555, 1, 0
      %v2588 = vsel %vm2556, 1, 0
      %v2589 = vsel %vm2557, 1, 0
      %v2590 = vsel %vm2558, 1, 0
      %v2591 = vsel %vm2559, 1, 0
      %v2592 = vsel %vm2560, 1, 0
      %v2593 = vsel %vm2561, 1, 0
      %v2594 = vsel %vm2562, 1, 0
      %v2595 = vsel %vm2563, 1, 0
      %v2596 = vsel %vm2564, 1, 0
      %v2597 = vsel %vm2565, 1, 0
      %v2598 = vadd.s32 %v2374, %v2566
      %v2599 = vadd.s32 %v2375, %v2567
      %v2600 = vadd.s32 %v2376, %v2568
      %v2601 = vadd.s32 %v2377, %v2569
      %v2602 = vadd.s32 %v2378, %v2570
      %v2603 = vadd.s32 %v2379, %v2571
      %v2604 = vadd.s32 %v2380, %v2572
      %v2605 = vadd.s32 %v2381, %v2573
      %v2606 = vadd.s32 %v2382, %v2574
      %v2607 = vadd.s32 %v2383, %v2575
      %v2608 = vadd.s32 %v2384, %v2576
      %v2609 = vadd.s32 %v2385, %v2577
      %v2610 = vadd.s32 %v2386, %v2578
      %v2611 = vadd.s32 %v2387, %v2579
      %v2612 = vadd.s32 %v2388, %v2580
      %v2613 = vadd.s32 %v2389, %v2581
      %v2614 = vadd.s32 %v2390, %v2582
      %v2615 = vadd.s32 %v2391, %v2583
      %v2616 = vadd.s32 %v2392, %v2584
      %v2617 = vadd.s32 %v2393, %v2585
      %v2618 = vadd.s32 %v2394, %v2586
      %v2619 = vadd.s32 %v2395, %v2587
      %v2620 = vadd.s32 %v2396, %v2588
      %v2621 = vadd.s32 %v2397, %v2589
      %v2622 = vadd.s32 %v2398, %v2590
      %v2623 = vadd.s32 %v2399, %v2591
      %v2624 = vadd.s32 %v2400, %v2592
      %v2625 = vadd.s32 %v2401, %v2593
      %v2626 = vadd.s32 %v2402, %v2594
      %v2627 = vadd.s32 %v2403, %v2595
      %v2628 = vadd.s32 %v2404, %v2596
      %v2629 = vadd.s32 %v2405, %v2597
      %v2630 = vcvt.s32.f32 %v2598
      %v2631 = vcvt.s32.f32 %v2599
      %v2632 = vcvt.s32.f32 %v2600
      %v2633 = vcvt.s32.f32 %v2601
      %v2634 = vcvt.s32.f32 %v2602
      %v2635 = vcvt.s32.f32 %v2603
      %v2636 = vcvt.s32.f32 %v2604
      %v2637 = vcvt.s32.f32 %v2605
      %v2638 = vcvt.s32.f32 %v2606
      %v2639 = vcvt.s32.f32 %v2607
      %v2640 = vcvt.s32.f32 %v2608
      %v2641 = vcvt.s32.f32 %v2609
      %v2642 = vcvt.s32.f32 %v2610
      %v2643 = vcvt.s32.f32 %v2611
      %v2644 = vcvt.s32.f32 %v2612
      %v2645 = vcvt.s32.f32 %v2613
      %v2646 = vcvt.s32.f32 %v2614
      %v2647 = vcvt.s32.f32 %v2615
      %v2648 = vcvt.s32.f32 %v2616
      %v2649 = vcvt.s32.f32 %v2617
      %v2650 = vcvt.s32.f32 %v2618
      %v2651 = vcvt.s32.f32 %v2619
      %v2652 = vcvt.s32.f32 %v2620
      %v2653 = vcvt.s32.f32 %v2621
      %v2654 = vcvt.s32.f32 %v2622
      %v2655 = vcvt.s32.f32 %v2623
      %v2656 = vcvt.s32.f32 %v2624
      %v2657 = vcvt.s32.f32 %v2625
      %v2658 = vcvt.s32.f32 %v2626
      %v2659 = vcvt.s32.f32 %v2627
      %v2660 = vcvt.s32.f32 %v2628
      %v2661 = vcvt.s32.f32 %v2629
      %v2662 = vld [vmem:[%s1 + $0x80] sm:$0xff]
      %v2663 = vld [vmem:[%s1 + $0x88] sm:$0xff]
      %v2664 = vld [vmem:[%s1 + $0x90] sm:$0xff]
      %v2665 = vld [vmem:[%s1 + $0x98] sm:$0xff]
      %v2666 = vld [vmem:[%s1 + $0xa0] sm:$0xff]
      %v2667 = vld [vmem:[%s1 + $0xa8] sm:$0xff]
      %v2668 = vld [vmem:[%s1 + $0xb0] sm:$0xff]
      %v2669 = vld [vmem:[%s1 + $0xb8] sm:$0xff]
      %v2670 = vld [vmem:[%s1 + $0xc0] sm:$0xff]
      %v2671 = vld [vmem:[%s1 + $0xc8] sm:$0xff]
      %v2672 = vld [vmem:[%s1 + $0xd0] sm:$0xff]
      %v2673 = vld [vmem:[%s1 + $0xd8] sm:$0xff]
      %v2674 = vld [vmem:[%s1 + $0xe0] sm:$0xff]
      %v2675 = vld [vmem:[%s1 + $0xe8] sm:$0xff]
      %v2676 = vld [vmem:[%s1 + $0xf0] sm:$0xff]
      %v2677 = vld [vmem:[%s1 + $0xf8] sm:$0xff]
      %2678 = vmatprep.subr.mxu0 0.0
      %2679 = vmatpush1.msra.mxu0 %v2662
      %2680 = vmatprep.subr.mxu0 0.0
      %2681 = vmatpush1.msra.mxu0 %v2663
      %2682 = vmatprep.subr.mxu0 0.0
      %2683 = vmatpush1.msra.mxu0 %v2664
      %2684 = vmatprep.subr.mxu0 0.0
      %2685 = vmatpush1.msra.mxu0 %v2665
      %2686 = vmatprep.subr.mxu0 0.0
      %2687 = vmatpush1.msra.mxu0 %v2666
      %2688 = vmatprep.subr.mxu0 0.0
      %2689 = vmatpush1.msra.mxu0 %v2667
      %2690 = vmatprep.subr.mxu0 0.0
      %2691 = vmatpush1.msra.mxu0 %v2668
      %2692 = vmatprep.subr.mxu0 0.0
      %2693 = vmatpush1.msra.mxu0 %v2669
      %2694 = vmatprep.subr.mxu0 0.0
      %2695 = vmatpush1.msra.mxu0 %v2670
      %2696 = vmatprep.subr.mxu0 0.0
      %2697 = vmatpush1.msra.mxu0 %v2671
      %2698 = vmatprep.subr.mxu0 0.0
      %2699 = vmatpush1.msra.mxu0 %v2672
      %2700 = vmatprep.subr.mxu0 0.0
      %2701 = vmatpush1.msra.mxu0 %v2673
      %2702 = vmatprep.subr.mxu0 0.0
      %2703 = vmatpush1.msra.mxu0 %v2674
      %2704 = vmatprep.subr.mxu0 0.0
      %2705 = vmatpush1.msra.mxu0 %v2675
      %2706 = vmatprep.subr.mxu0 0.0
      %2707 = vmatpush1.msra.mxu0 %v2676
      %2708 = vmatprep.subr.mxu0 0.0
      %2709 = vmatpush1.msra.mxu0 %v2677
      %2710 = vmatprep.subr.mxu0 0.0
      %2711 = vmatpush1.msra.mxu0 0.0
      %2712 = vmatprep.subr.mxu0 0.0
      %2713 = vmatpush1.msra.mxu0 0.0
      %2714 = vmatprep.subr.mxu0 0.0
      %2715 = vmatpush1.msra.mxu0 0.0
      %2716 = vmatprep.subr.mxu0 0.0
      %2717 = vmatpush1.msra.mxu0 0.0
      %2718 = vmatprep.subr.mxu0 0.0
      %2719 = vmatpush1.msra.mxu0 0.0
      %2720 = vmatprep.subr.mxu0 0.0
      %2721 = vmatpush1.msra.mxu0 0.0
      %2722 = vmatprep.subr.mxu0 0.0
      %2723 = vmatpush1.msra.mxu0 0.0
      %2724 = vmatprep.subr.mxu0 0.0
      %2725 = vmatpush1.msra.mxu0 0.0
      %2726 = vmatprep.subr.mxu0 0.0
      %2727 = vmatpush1.msra.mxu0 0.0
      %2728 = vmatprep.subr.mxu0 0.0
      %2729 = vmatpush1.msra.mxu0 0.0
      %2730 = vmatprep.subr.mxu0 0.0
      %2731 = vmatpush1.msra.mxu0 0.0
      %2732 = vmatprep.subr.mxu0 0.0
      %2733 = vmatpush1.msra.mxu0 0.0
      %2734 = vmatprep.subr.mxu0 0.0
      %2735 = vmatpush1.msra.mxu0 0.0
      %2736 = vmatprep.subr.mxu0 0.0
      %2737 = vmatpush1.msra.mxu0 0.0
      %2738 = vmatprep.subr.mxu0 0.0
      %2739 = vmatpush1.msra.mxu0 0.0
      %2740 = vmatprep.subr.mxu0 0.0
      %2741 = vmatpush1.msra.mxu0 0.0
      %2742 = vmatprep.mubr.f32.mxu0 0.0
      %2743 = vmatmul.mubr.f32.gmra.mrb[0].mxu0 %v2630
      %v2744 = vpop.f32.mrb[0].mxu0
      %v2745 = vadd.f32 0.0, %v2744
      %v2746 = vpop.f32.mrb[0].mxu0
      %2747 = vmatprep.mubr.f32.mxu0 0.0
      %2748 = vmatmul.mubr.f32.gmra.mrb[0].mxu0 %v2631
      %v2749 = vpop.f32.mrb[0].mxu0
      %v2750 = vadd.f32 0.0, %v2749
      %v2751 = vpop.f32.mrb[0].mxu0
      %2752 = vmatprep.mubr.f32.mxu0 0.0
      %2753 = vmatmul.mubr.f32.gmra.mrb[0].mxu0 %v2632
      %v2754 = vpop.f32.mrb[0].mxu0
      %v2755 = vadd.f32 0.0, %v2754
      %v2756 = vpop.f32.mrb[0].mxu0
      %2757 = vmatprep.mubr.f32.mxu0 0.0
      %2758 = vmatmul.mubr.f32.gmra.mrb[0].mxu0 %v2633
      %v2759 = vpop.f32.mrb[0].mxu0
      %v2760 = vadd.f32 0.0, %v2759
      %v2761 = vpop.f32.mrb[0].mxu0
      %2762 = vmatprep.mubr.f32.mxu0 0.0
      %2763 = vmatmul.mubr.f32.gmra.mrb[0].mxu0 %v2634
      %v2764 = vpop.f32.mrb[0].mxu0
      %v2765 = vadd.f32 0.0, %v2764
      %v2766 = vpop.f32.mrb[0].mxu0
      %2767 = vmatprep.mubr.f32.mxu0 0.0
      %2768 = vmatmul.mubr.f32.gmra.mrb[0].mxu0 %v2635
      %v2769 = vpop.f32.mrb[0].mxu0
      %v2770 = vadd.f32 0.0, %v2769
      %v2771 = vpop.f32.mrb[0].mxu0
      %2772 = vmatprep.mubr.f32.mxu0 0.0
      %2773 = vmatmul.mubr.f32.gmra.mrb[0].mxu0 %v2636
      %v2774 = vpop.f32.mrb[0].mxu0
      %v2775 = vadd.f32 0.0, %v2774
      %v2776 = vpop.f32.mrb[0].mxu0
      %2777 = vmatprep.mubr.f32.mxu0 0.0
      %2778 = vmatmul.mubr.f32.gmra.mrb[0].mxu0 %v2637
      %v2779 = vpop.f32.mrb[0].mxu0
      %v2780 = vadd.f32 0.0, %v2779
      %v2781 = vpop.f32.mrb[0].mxu0
      %2782 = vmatprep.mubr.f32.mxu0 0.0
      %2783 = vmatmul.mubr.f32.gmra.mrb[0].mxu0 %v2638
      %v2784 = vpop.f32.mrb[0].mxu0
      %v2785 = vadd.f32 0.0, %v2784
      %v2786 = vpop.f32.mrb[0].mxu0
      %2787 = vmatprep.mubr.f32.mxu0 0.0
      %2788 = vmatmul.mubr.f32.gmra.mrb[0].mxu0 %v2639
      %v2789 = vpop.f32.mrb[0].mxu0
      %v2790 = vadd.f32 0.0, %v2789
      %v2791 = vpop.f32.mrb[0].mxu0
      %2792 = vmatprep.mubr.f32.mxu0 0.0
      %2793 = vmatmul.mubr.f32.gmra.mrb[0].mxu0 %v2640
      %v2794 = vpop.f32.mrb[0].mxu0
      %v2795 = vadd.f32 0.0, %v2794
      %v2796 = vpop.f32.mrb[0].mxu0
      %2797 = vmatprep.mubr.f32.mxu0 0.0
      %2798 = vmatmul.mubr.f32.gmra.mrb[0].mxu0 %v2641
      %v2799 = vpop.f32.mrb[0].mxu0
      %v2800 = vadd.f32 0.0, %v2799
      %v2801 = vpop.f32.mrb[0].mxu0
      %2802 = vmatprep.mubr.f32.mxu0 0.0
      %2803 = vmatmul.mubr.f32.gmra.mrb[0].mxu0 %v2642
      %v2804 = vpop.f32.mrb[0].mxu0
      %v2805 = vadd.f32 0.0, %v2804
      %v2806 = vpop.f32.mrb[0].mxu0
      %2807 = vmatprep.mubr.f32.mxu0 0.0
      %2808 = vmatmul.mubr.f32.gmra.mrb[0].mxu0 %v2643
      %v2809 = vpop.f32.mrb[0].mxu0
      %v2810 = vadd.f32 0.0, %v2809
      %v2811 = vpop.f32.mrb[0].mxu0
      %2812 = vmatprep.mubr.f32.mxu0 0.0
      %2813 = vmatmul.mubr.f32.gmra.mrb[0].mxu0 %v2644
      %v2814 = vpop.f32.mrb[0].mxu0
      %v2815 = vadd.f32 0.0, %v2814
      %v2816 = vpop.f32.mrb[0].mxu0
      %2817 = vmatprep.mubr.f32.mxu0 0.0
      %2818 = vmatmul.mubr.f32.gmra.mrb[0].mxu0 %v2645
      %v2819 = vpop.f32.mrb[0].mxu0
      %v2820 = vadd.f32 0.0, %v2819
      %v2821 = vpop.f32.mrb[0].mxu0
      %2822 = vmatprep.mubr.f32.mxu0 0.0
      %2823 = vmatmul.mubr.f32.gmra.mrb[0].mxu0 %v2646
      %v2824 = vpop.f32.mrb[0].mxu0
      %v2825 = vadd.f32 0.0, %v2824
      %v2826 = vpop.f32.mrb[0].mxu0
      %2827 = vmatprep.mubr.f32.mxu0 0.0
      %2828 = vmatmul.mubr.f32.gmra.mrb[0].mxu0 %v2647
      %v2829 = vpop.f32.mrb[0].mxu0
      %v2830 = vadd.f32 0.0, %v2829
      %v2831 = vpop.f32.mrb[0].mxu0
      %2832 = vmatprep.mubr.f32.mxu0 0.0
      %2833 = vmatmul.mubr.f32.gmra.mrb[0].mxu0 %v2648
      %v2834 = vpop.f32.mrb[0].mxu0
      %v2835 = vadd.f32 0.0, %v2834
      %v2836 = vpop.f32.mrb[0].mxu0
      %2837 = vmatprep.mubr.f32.mxu0 0.0
      %2838 = vmatmul.mubr.f32.gmra.mrb[0].mxu0 %v2649
      %v2839 = vpop.f32.mrb[0].mxu0
      %v2840 = vadd.f32 0.0, %v2839
      %v2841 = vpop.f32.mrb[0].mxu0
      %2842 = vmatprep.mubr.f32.mxu0 0.0
      %2843 = vmatmul.mubr.f32.gmra.mrb[0].mxu0 %v2650
      %v2844 = vpop.f32.mrb[0].mxu0
      %v2845 = vadd.f32 0.0, %v2844
      %v2846 = vpop.f32.mrb[0].mxu0
      %2847 = vmatprep.mubr.f32.mxu0 0.0
      %2848 = vmatmul.mubr.f32.gmra.mrb[0].mxu0 %v2651
      %v2849 = vpop.f32.mrb[0].mxu0
      %v2850 = vadd.f32 0.0, %v2849
      %v2851 = vpop.f32.mrb[0].mxu0
      %2852 = vmatprep.mubr.f32.mxu0 0.0
      %2853 = vmatmul.mubr.f32.gmra.mrb[0].mxu0 %v2652
      %v2854 = vpop.f32.mrb[0].mxu0
      %v2855 = vadd.f32 0.0, %v2854
      %v2856 = vpop.f32.mrb[0].mxu0
      %2857 = vmatprep.mubr.f32.mxu0 0.0
      %2858 = vmatmul.mubr.f32.gmra.mrb[0].mxu0 %v2653
      %v2859 = vpop.f32.mrb[0].mxu0
      %v2860 = vadd.f32 0.0, %v2859
      %v2861 = vpop.f32.mrb[0].mxu0
      %2862 = vmatprep.mubr.f32.mxu0 0.0
      %2863 = vmatmul.mubr.f32.gmra.mrb[0].mxu0 %v2654
      %v2864 = vpop.f32.mrb[0].mxu0
      %v2865 = vadd.f32 0.0, %v2864
      %v2866 = vpop.f32.mrb[0].mxu0
      %2867 = vmatprep.mubr.f32.mxu0 0.0
      %2868 = vmatmul.mubr.f32.gmra.mrb[0].mxu0 %v2655
      %v2869 = vpop.f32.mrb[0].mxu0
      %v2870 = vadd.f32 0.0, %v2869
      %v2871 = vpop.f32.mrb[0].mxu0
      %2872 = vmatprep.mubr.f32.mxu0 0.0
      %2873 = vmatmul.mubr.f32.gmra.mrb[0].mxu0 %v2656
      %v2874 = vpop.f32.mrb[0].mxu0
      %v2875 = vadd.f32 0.0, %v2874
      %v2876 = vpop.f32.mrb[0].mxu0
      %2877 = vmatprep.mubr.f32.mxu0 0.0
      %2878 = vmatmul.mubr.f32.gmra.mrb[0].mxu0 %v2657
      %v2879 = vpop.f32.mrb[0].mxu0
      %v2880 = vadd.f32 0.0, %v2879
      %v2881 = vpop.f32.mrb[0].mxu0
      %2882 = vmatprep.mubr.f32.mxu0 0.0
      %2883 = vmatmul.mubr.f32.gmra.mrb[0].mxu0 %v2658
      %v2884 = vpop.f32.mrb[0].mxu0
      %v2885 = vadd.f32 0.0, %v2884
      %v2886 = vpop.f32.mrb[0].mxu0
      %2887 = vmatprep.mubr.f32.mxu0 0.0
      %2888 = vmatmul.mubr.f32.gmra.mrb[0].mxu0 %v2659
      %v2889 = vpop.f32.mrb[0].mxu0
      %v2890 = vadd.f32 0.0, %v2889
      %v2891 = vpop.f32.mrb[0].mxu0
      %2892 = vmatprep.mubr.f32.mxu0 0.0
      %2893 = vmatmul.mubr.f32.gmra.mrb[0].mxu0 %v2660
      %v2894 = vpop.f32.mrb[0].mxu0
      %v2895 = vadd.f32 0.0, %v2894
      %v2896 = vpop.f32.mrb[0].mxu0
      %2897 = vmatprep.mubr.f32.mxu0 0.0
      %2898 = vmatmul.mubr.f32.gmra.mrb[0].mxu0 %v2661
      %v2899 = vpop.f32.mrb[0].mxu0
      %v2900 = vadd.f32 0.0, %v2899
      %v2901 = vpop.f32.mrb[0].mxu0
      %2902 = vdwg.mxu0
      %v2903 = vld [vmem:[%s145] sm:$0xff]
      %v2904 = vld [vmem:[%s145 + $0x8] sm:$0xff]
      %v2905 = vld [vmem:[%s145 + $0x10] sm:$0xff]
      %v2906 = vld [vmem:[%s145 + $0x18] sm:$0xff]
      %v2907 = vld [vmem:[%s145 + $0x20] sm:$0xff]
      %v2908 = vld [vmem:[%s145 + $0x28] sm:$0xff]
      %v2909 = vld [vmem:[%s145 + $0x30] sm:$0xff]
      %v2910 = vld [vmem:[%s145 + $0x38] sm:$0xff]
      %v2911 = vld [vmem:[%s145 + $0x40] sm:$0xff]
      %v2912 = vld [vmem:[%s145 + $0x48] sm:$0xff]
      %v2913 = vld [vmem:[%s145 + $0x50] sm:$0xff]
      %v2914 = vld [vmem:[%s145 + $0x58] sm:$0xff]
      %v2915 = vld [vmem:[%s145 + $0x60] sm:$0xff]
      %v2916 = vld [vmem:[%s145 + $0x68] sm:$0xff]
      %v2917 = vld [vmem:[%s145 + $0x70] sm:$0xff]
      %v2918 = vld [vmem:[%s145 + $0x78] sm:$0xff]
      %v2919 = vld [vmem:[%s145 + $0x80] sm:$0xff]
      %v2920 = vld [vmem:[%s145 + $0x88] sm:$0xff]
      %v2921 = vld [vmem:[%s145 + $0x90] sm:$0xff]
      %v2922 = vld [vmem:[%s145 + $0x98] sm:$0xff]
      %v2923 = vld [vmem:[%s145 + $0xa0] sm:$0xff]
      %v2924 = vld [vmem:[%s145 + $0xa8] sm:$0xff]
      %v2925 = vld [vmem:[%s145 + $0xb0] sm:$0xff]
      %v2926 = vld [vmem:[%s145 + $0xb8] sm:$0xff]
      %v2927 = vld [vmem:[%s145 + $0xc0] sm:$0xff]
      %v2928 = vld [vmem:[%s145 + $0xc8] sm:$0xff]
      %v2929 = vld [vmem:[%s145 + $0xd0] sm:$0xff]
      %v2930 = vld [vmem:[%s145 + $0xd8] sm:$0xff]
      %v2931 = vld [vmem:[%s145 + $0xe0] sm:$0xff]
      %v2932 = vld [vmem:[%s145 + $0xe8] sm:$0xff]
      %v2933 = vld [vmem:[%s145 + $0xf0] sm:$0xff]
      %v2934 = vld [vmem:[%s145 + $0xf8] sm:$0xff]
      %v2935 = vadd.f32 %v2903, %v2745
      %v2936 = vadd.f32 %v2904, %v2750
      %v2937 = vadd.f32 %v2905, %v2755
      %v2938 = vadd.f32 %v2906, %v2760
      %v2939 = vadd.f32 %v2907, %v2765
      %v2940 = vadd.f32 %v2908, %v2770
      %v2941 = vadd.f32 %v2909, %v2775
      %v2942 = vadd.f32 %v2910, %v2780
      %v2943 = vadd.f32 %v2911, %v2785
      %v2944 = vadd.f32 %v2912, %v2790
      %v2945 = vadd.f32 %v2913, %v2795
      %v2946 = vadd.f32 %v2914, %v2800
      %v2947 = vadd.f32 %v2915, %v2805
      %v2948 = vadd.f32 %v2916, %v2810
      %v2949 = vadd.f32 %v2917, %v2815
      %v2950 = vadd.f32 %v2918, %v2820
      %v2951 = vadd.f32 %v2919, %v2825
      %v2952 = vadd.f32 %v2920, %v2830
      %v2953 = vadd.f32 %v2921, %v2835
      %v2954 = vadd.f32 %v2922, %v2840
      %v2955 = vadd.f32 %v2923, %v2845
      %v2956 = vadd.f32 %v2924, %v2850
      %v2957 = vadd.f32 %v2925, %v2855
      %v2958 = vadd.f32 %v2926, %v2860
      %v2959 = vadd.f32 %v2927, %v2865
      %v2960 = vadd.f32 %v2928, %v2870
      %v2961 = vadd.f32 %v2929, %v2875
      %v2962 = vadd.f32 %v2930, %v2880
      %v2963 = vadd.f32 %v2931, %v2885
      %v2964 = vadd.f32 %v2932, %v2890
      %v2965 = vadd.f32 %v2933, %v2895
      %v2966 = vadd.f32 %v2934, %v2900
      %2967 = vst [vmem:[%s145] sm:$0xff] %v2935
      %2968 = vst [vmem:[%s145 + $0x8] sm:$0xff] %v2936
      %2969 = vst [vmem:[%s145 + $0x10] sm:$0xff] %v2937
      %2970 = vst [vmem:[%s145 + $0x18] sm:$0xff] %v2938
      %2971 = vst [vmem:[%s145 + $0x20] sm:$0xff] %v2939
      %2972 = vst [vmem:[%s145 + $0x28] sm:$0xff] %v2940
      %2973 = vst [vmem:[%s145 + $0x30] sm:$0xff] %v2941
      %2974 = vst [vmem:[%s145 + $0x38] sm:$0xff] %v2942
      %2975 = vst [vmem:[%s145 + $0x40] sm:$0xff] %v2943
      %2976 = vst [vmem:[%s145 + $0x48] sm:$0xff] %v2944
      %2977 = vst [vmem:[%s145 + $0x50] sm:$0xff] %v2945
      %2978 = vst [vmem:[%s145 + $0x58] sm:$0xff] %v2946
      %2979 = vst [vmem:[%s145 + $0x60] sm:$0xff] %v2947
      %2980 = vst [vmem:[%s145 + $0x68] sm:$0xff] %v2948
      %2981 = vst [vmem:[%s145 + $0x70] sm:$0xff] %v2949
      %2982 = vst [vmem:[%s145 + $0x78] sm:$0xff] %v2950
      %2983 = vst [vmem:[%s145 + $0x80] sm:$0xff] %v2951
      %2984 = vst [vmem:[%s145 + $0x88] sm:$0xff] %v2952
      %2985 = vst [vmem:[%s145 + $0x90] sm:$0xff] %v2953
      %2986 = vst [vmem:[%s145 + $0x98] sm:$0xff] %v2954
      %2987 = vst [vmem:[%s145 + $0xa0] sm:$0xff] %v2955
      %2988 = vst [vmem:[%s145 + $0xa8] sm:$0xff] %v2956
      %2989 = vst [vmem:[%s145 + $0xb0] sm:$0xff] %v2957
      %2990 = vst [vmem:[%s145 + $0xb8] sm:$0xff] %v2958
      %2991 = vst [vmem:[%s145 + $0xc0] sm:$0xff] %v2959
      %2992 = vst [vmem:[%s145 + $0xc8] sm:$0xff] %v2960
      %2993 = vst [vmem:[%s145 + $0xd0] sm:$0xff] %v2961
      %2994 = vst [vmem:[%s145 + $0xd8] sm:$0xff] %v2962
      %2995 = vst [vmem:[%s145 + $0xe0] sm:$0xff] %v2963
      %2996 = vst [vmem:[%s145 + $0xe8] sm:$0xff] %v2964
      %2997 = vst [vmem:[%s145 + $0xf0] sm:$0xff] %v2965
      %2998 = vst [vmem:[%s145 + $0xf8] sm:$0xff] %v2966
      %s2999 = smul.u32 32, %s13
      %p3000 = scmp.lt.s32.totalorder %s2999, 63
      %s3001 = scalar_select %p3000, %s2999, 63
      %s3002 = smul.addr %s3001, 8
      %s3003 = scalar_lea.vmem %s2, %s3002
      // Predicated region
      $region29: #{atom_encoder.1} parent=27 // pred_check
        %p3004 = pneg %p78
      $region30: #{atom_encoder.1} parent=27 // pred_check_branch
        %3006 = sbr.rel (%p3004) target = $region32
      $region31: #{atom_encoder.1} parent=27 // pred_region
        %s3007 = smul.u32 32, %s13
      $region32: #{atom_encoder.1} parent=27 // pred_fallthru
        _
    $region28: #{atom_encoder.1} parent=5 // pred_fallthru
      _
    %p3008 = scmp.le.s32.totalorder 2, %s8
    // Predicated region
    $region33: #{atom_encoder.1} parent=5 // pred_check
      %p3009 = pneg %p3008
    $region34: #{atom_encoder.1} parent=5 // pred_check_branch
      %3011 = sbr.rel (%p3009) target = $region36
    $region35: #{atom_encoder.1} parent=5 // pred_region
      %s3012 = ssub.s32 %s8, 2
      // Predicated region
      $region37: #{atom_encoder.1} parent=35 // pred_check
        %p3013 = pneg %p84
      $region38: #{atom_encoder.1} parent=35 // pred_check_branch
        %3015 = sbr.rel (%p3013) target = $region40
      $region39: #{atom_encoder.1} parent=35 // pred_region
        %s3016 = smul.u32 32, %s14
        %p3017 = scmp.lt.s32.totalorder %s3016, 63
        %s3018 = scalar_select %p3017, %s3016, 63
        %s3019 = smul.addr %s3018, 8
        %s3020 = scalar_lea.vmem %s2, %s3019
      $region40: #{atom_encoder.1} parent=35 // pred_fallthru
        _
    $region36: #{atom_encoder.1} parent=5 // pred_fallthru
      _
  $region6: #{atom_encoder.1} parent=0 // loop_footer
    %s12 = sadd.s32 1, %s8
  $region7: #{atom_encoder.1} parent=0 // loop_footer_branch
    %7 = sbr.rel target = $region3
  $region8: #{atom_encoder.1} parent=0 // loop_exit
    _

</llo_original>
